<compile_context>
chip_gen: v5e
topology: v5e:2x2
jax: 0.10.0
libtpu: 0.0.40
codegen_flags: <defaults>
</compile_context>

<pallas_src>
import functools

import jax
import jax.numpy as jnp
from jax.experimental import pallas as pl
from jax.experimental.pallas import tpu as pltpu

LEAKY_SLOPE = 0.1
BN_EPS = 1e-5          # nn.BatchNorm2d default
LANE = 128


# ------------------------------ small helpers ------------------------------ #
def _round_up(x, m):
    return (x + m - 1) // m * m


def _choose_tm(m_rows, target=512):
    """Row tile: big enough to amortize per-grid-step overhead, >=2 grid steps
    (megacore) when the problem allows it, multiple of 16 (bf16 sublanes)."""
    if m_rows >= 2 * target:
        return target
    return max(16, _round_up((m_rows + 1) // 2, 16))


def _largest_divisor_leq(n, cap):
    cap = max(1, min(n, cap))
    for d in range(cap, 0, -1):
        if n % d == 0:
            return d
    return 1


# ----------------------------- Pallas kernels ------------------------------ #
def conv_stats_kernel(p_ref, w_ref, b_ref, y_ref, s_ref, ss_ref, acc_ref):
    """Conv matmul with K-axis accumulation; on the last K step adds bias and
    writes y plus per-channel partial sum / sumsq for the BN batch stats."""
    k = pl.program_id(1)

    @pl.when(k == 0)
    def _():
        acc_ref[...] = jnp.zeros_like(acc_ref)

    acc_ref[...] += jnp.dot(p_ref[...], w_ref[...],
                            preferred_element_type=jnp.float32)

    @pl.when(k == pl.num_programs(1) - 1)
    def _():
        y = acc_ref[...] + b_ref[...]
        y_ref[...] = y
        s = jnp.sum(y, axis=0)[None, None, :]          # (1, 1, Cp)
        ss = jnp.sum(y * y, axis=0)[None, None, :]
        s_ref[...] = jnp.broadcast_to(s, s_ref.shape)   # (1, 8, Cp)
        ss_ref[...] = jnp.broadcast_to(ss, ss_ref.shape)


def bn_lrelu_kernel(y_ref, sc_ref, sh_ref, o_ref):
    """Fused BatchNorm (folded into per-channel scale/shift) + LeakyReLU."""
    z = y_ref[...] * sc_ref[...] + sh_ref[...]
    o_ref[...] = jnp.where(z >= 0, z, LEAKY_SLOPE * z)


def bn_lrelu_pool_kernel(y_ref, sc2_ref, sh2_ref, o_ref):
    """Fused BatchNorm + LeakyReLU + 2x2 max pool.

    y_ref block: (th, 2, Wpool, 2*Cp) -- (pooled row, row-in-pair, pooled col,
    col-in-pair folded into lanes).  sc2/sh2 are the per-channel scale/shift
    tiled twice along lanes so they line up with the folded column pairs.
    """
    cp = o_ref.shape[-1]

    def act(v):
        z = v * sc2_ref[...] + sh2_ref[...]
        return jnp.where(z >= 0, z, LEAKY_SLOPE * z)

    zt = act(y_ref[:, 0, :, :])                          # (th, Wpool, 2*Cp)
    zb = act(y_ref[:, 1, :, :])
    m = jnp.maximum(zt, zb)                              # max over row pair
    o_ref[...] = jnp.maximum(m[..., :cp], m[..., cp:])   # max over col pair


# ---------------------------- pallas_call wrappers -------------------------- #
def conv_bn_stats(patches, w_mat, bias, tm, tk):
    """y = patches @ w_mat + bias, plus per-M-tile partial (sum, sumsq)."""
    Mp, Kp = patches.shape
    Cp = w_mat.shape[1]
    nmt, nkt = Mp // tm, Kp // tk

    esz = patches.dtype.itemsize
    need = (2 * tm * tk * esz          # patch blocks (double buffered)
            + 2 * tk * Cp * esz        # weight blocks
            + 2 * Cp * 4               # bias
            + 2 * tm * Cp * 4          # y output blocks
            + 4 * 8 * Cp * 4           # stat output blocks
            + tm * Cp * 4)             # f32 accumulator scratch
    vmem_limit = int(min(64 << 20, max(2 * need + (2 << 20), 16 << 20)))

    return pl.pallas_call(
        conv_stats_kernel,
        out_shape=(
            jax.ShapeDtypeStruct((Mp, Cp), jnp.float32),
            jax.ShapeDtypeStruct((nmt, 8, Cp), jnp.float32),
            jax.ShapeDtypeStruct((nmt, 8, Cp), jnp.float32),
        ),
        grid=(nmt, nkt),
        in_specs=[
            pl.BlockSpec((tm, tk), lambda i, k: (i, k)),
            pl.BlockSpec((tk, Cp), lambda i, k: (k, 0)),
            pl.BlockSpec((1, Cp), lambda i, k: (0, 0)),
        ],
        out_specs=(
            pl.BlockSpec((tm, Cp), lambda i, k: (i, 0)),
            pl.BlockSpec((1, 8, Cp), lambda i, k: (i, 0, 0)),
            pl.BlockSpec((1, 8, Cp), lambda i, k: (i, 0, 0)),
        ),
        scratch_shapes=[pltpu.VMEM((tm, Cp), jnp.float32)],
        compiler_params=pltpu.CompilerParams(
            dimension_semantics=("parallel", "arbitrary"),
            vmem_limit_bytes=vmem_limit,
        ),
    )(patches, w_mat, bias)


def bn_lrelu(y, scale, shift, tm):
    Mp, Cp = y.shape
    return pl.pallas_call(
        bn_lrelu_kernel,
        out_shape=jax.ShapeDtypeStruct((Mp, Cp), jnp.float32),
        grid=(Mp // tm,),
        in_specs=[
            pl.BlockSpec((tm, Cp), lambda i: (i, 0)),
            pl.BlockSpec((1, Cp), lambda i: (0, 0)),
            pl.BlockSpec((1, Cp), lambda i: (0, 0)),
        ],
        out_specs=pl.BlockSpec((tm, Cp), lambda i: (i, 0)),
        compiler_params=pltpu.CompilerParams(
            dimension_semantics=("parallel",)),
    )(y, scale.reshape(1, Cp), shift.reshape(1, Cp))


def bn_lrelu_maxpool(y_pairs, scale2, shift2, th):
    NH, _, Wpool, C2 = y_pairs.shape       # (N*Hpool, 2, Wpool, 2*Cp)
    Cp = C2 // 2
    return pl.pallas_call(
        bn_lrelu_pool_kernel,
        out_shape=jax.ShapeDtypeStruct((NH, Wpool, Cp), jnp.float32),
        grid=(NH // th,),
        in_specs=[
            pl.BlockSpec((th, 2, Wpool, C2), lambda i: (i, 0, 0, 0)),
            pl.BlockSpec((1, C2), lambda i: (0, 0)),
            pl.BlockSpec((1, C2), lambda i: (0, 0)),
        ],
        out_specs=pl.BlockSpec((th, Wpool, Cp), lambda i: (i, 0, 0)),
        compiler_params=pltpu.CompilerParams(
            dimension_semantics=("parallel",)),
    )(y_pairs, scale2.reshape(1, C2), shift2.reshape(1, C2))


# ------------------------------ CNNBlock forward ---------------------------- #
def cnn_block_forward(x_nchw, params, *, stride=1, padding=0,
                      is_max_pool=False, mxu_dtype=jnp.bfloat16):
    w, b = params["conv_w"], params["conv_b"]
    gamma, beta = params["bn_gamma"], params["bn_beta"]
    Cout, Cin, K, _ = w.shape
    N, _, H, W = x_nchw.shape
    Hout = (H + 2 * padding - K) // stride + 1
    Wout = (W + 2 * padding - K) // stride + 1
    M = N * Hout * Wout

    # --- im2col in NHWC (cheap slices + one stack, no big transposes) ---
    # TODO(synk): replace wrapper-side im2col with in-kernel halo-block patch
    # extraction to avoid the K*K HBM expansion of the input.
    x_nhwc = jnp.transpose(x_nchw, (0, 2, 3, 1))
    xp = jnp.pad(x_nhwc, ((0, 0), (padding, padding), (padding, padding), (0, 0)))
    taps = [xp[:, di:di + stride * Hout:stride, dj:dj + stride * Wout:stride, :]
            for di in range(K) for dj in range(K)]
    patches = jnp.stack(taps, axis=3).reshape(M, K * K * Cin)   # (ki,kj,ci) order

    # --- padded / tiled sizes (lane-dense Cout, aligned K dim, M tiles) ---
    Cp = _round_up(Cout, LANE)
    Kdim = K * K * Cin
    tk = 512 if Kdim >= 512 else _round_up(Kdim, LANE)
    Kp = _round_up(Kdim, tk)
    tm = _choose_tm(M)
    Mp = _round_up(M, tm)

    patches_p = jnp.pad(patches.astype(mxu_dtype), ((0, Mp - M), (0, Kp - Kdim)))
    w_mat = jnp.transpose(w, (2, 3, 1, 0)).reshape(Kdim, Cout)  # (ki,kj,ci) x co
    w_p = jnp.pad(w_mat.astype(mxu_dtype), ((0, Kp - Kdim), (0, Cp - Cout)))
    b_p = jnp.pad(b.astype(jnp.float32), (0, Cp - Cout))

    # --- pass 1: conv matmul + partial BN batch statistics ---
    y, s_part, ss_part = conv_bn_stats(patches_p, w_p, b_p.reshape(1, Cp), tm, tk)

    # --- tiny XLA finalize: batch mean/var -> per-channel scale & shift ---
    # Each zero-padded row contributed exactly `bias` to the sums; remove it.
    pad_rows = float(Mp - M)
    sum_y = jnp.sum(s_part[:, 0, :], axis=0) - pad_rows * b_p
    sum_yy = jnp.sum(ss_part[:, 0, :], axis=0) - pad_rows * b_p * b_p
    mean = sum_y / float(M)
    var = jnp.maximum(sum_yy / float(M) - mean * mean, 0.0)  # biased (training BN)
    gamma_p = jnp.pad(gamma.astype(jnp.float32), (0, Cp - Cout))
    beta_p = jnp.pad(beta.astype(jnp.float32), (0, Cp - Cout))
    scale = gamma_p * jax.lax.rsqrt(var + BN_EPS)
    shift = beta_p - mean * scale
    # TODO(synk): nn.BatchNorm2d running_mean/running_var buffer updates are not
    # modelled; only the training-mode forward output is reproduced.

    # --- pass 2: fused normalize + LeakyReLU (+ 2x2 maxpool) ---
    if is_max_pool:
        Hpool, Wpool = Hout // 2, Wout // 2            # MaxPool2d(2) floors
        y4 = y[:M].reshape(N, Hout, Wout, Cp)[:, :2 * Hpool, :2 * Wpool, :]
        # free row-major re-view: (row pair -> axis, col pair -> lanes)
        y_pairs = y4.reshape(N * Hpool, 2, Wpool, 2 * Cp)
        NH = N * Hpool
        cap = max(1, min(1024 // max(1, Wpool), NH // 2 if NH > 1 else 1))
        th = _largest_divisor_leq(NH, cap)
        z = bn_lrelu_maxpool(y_pairs, jnp.tile(scale, 2), jnp.tile(shift, 2), th)
        out_nhwc = z.reshape(N, Hpool, Wpool, Cp)[..., :Cout]
    else:
        z = bn_lrelu(y, scale, shift, tm)
        out_nhwc = z[:M].reshape(N, Hout, Wout, Cp)[..., :Cout]

    return jnp.transpose(out_nhwc, (0, 3, 1, 2))       # back to NCHW


if __name__ == "__main__":
    key = jax.random.PRNGKey(0)
    k1, k2, k3 = jax.random.split(key, 3)

    Cin, Cout, K = 4, 8, 3
    x = jax.random.normal(k1, (2, Cin, 16, 16), dtype=jnp.float32)

    params = {
        "conv_w": 0.1 * jax.random.normal(k2, (Cout, Cin, K, K), dtype=jnp.float32),
        "conv_b": 0.1 * jax.random.normal(k3, (Cout,), dtype=jnp.float32),
        # nn.BatchNorm2d default parameter init: weight=1, bias=0
        "bn_gamma": jnp.ones((Cout,), jnp.float32),
        "bn_beta": jnp.zeros((Cout,), jnp.float32),
    }

    fwd_pool = jax.jit(functools.partial(
        cnn_block_forward, stride=1, padding=1, is_max_pool=True))
    fwd_nopool = jax.jit(functools.partial(
        cnn_block_forward, stride=1, padding=1, is_max_pool=False))

    out_pool = jax.block_until_ready(fwd_pool(x, params))
    out_nopool = jax.block_until_ready(fwd_nopool(x, params))

    assert out_pool.shape == (2, Cout, 8, 8)
    assert out_nopool.shape == (2, Cout, 16, 16)
    assert bool(jnp.isfinite(out_pool).all())
    assert bool(jnp.isfinite(out_nopool).all())
    print("KERNEL_OK")
</pallas_src>

<mosaic_0001>
module attributes {stable_mosaic.version = 11 : i64} {
  func.func @conv_stats_kernel(%arg0: i32, %arg1: i32, %arg2: memref<256x128xbf16, #tpu.memory_space<vmem>>, %arg3: memref<128x128xbf16, #tpu.memory_space<vmem>>, %arg4: memref<1x128xf32, #tpu.memory_space<vmem>>, %arg5: memref<256x128xf32, #tpu.memory_space<vmem>>, %arg6: memref<1x8x128xf32, #tpu.memory_space<vmem>>, %arg7: memref<1x8x128xf32, #tpu.memory_space<vmem>>, %arg8: memref<256x128xf32, #tpu.memory_space<vmem>>) attributes {dimension_semantics = [#tpu.dimension_semantics<parallel>, #tpu.dimension_semantics<arbitrary>], iteration_bounds = array<i64: 2, 1>, scalar_prefetch = 0 : i64, scratch_operands = 1 : i64, tpu.core_type = #tpu.core_type<tc>, window_params = [{transform_indices = @transform_0, window_bounds = array<i64: 256, 128>}, {transform_indices = @transform_1, window_bounds = array<i64: 128, 128>}, {pipeline_mode = #tpu.pipeline_mode<synchronous>, transform_indices = @transform_2, window_bounds = array<i64: 1, 128>}, {transform_indices = @transform_3, window_bounds = array<i64: 256, 128>}, {transform_indices = @transform_4, window_bounds = array<i64: 1, 8, 128>}, {transform_indices = @transform_5, window_bounds = array<i64: 1, 8, 128>}]} {
    %c0_i32 = arith.constant 0 : i32
    %0 = arith.cmpi eq, %arg1, %c0_i32 : i32
    %1 = arith.extui %0 : i1 to i32
    %c0_i32_0 = arith.constant 0 : i32
    %2 = arith.cmpi ne, %1, %c0_i32_0 : i32
    scf.if %2 {
      %cst_10 = arith.constant 0.000000e+00 : f32
      %12 = vector.broadcast %cst_10 : f32 to vector<256x128xf32>
      %c0_11 = arith.constant 0 : index
      %c0_12 = arith.constant 0 : index
      %13 = vector.load %arg8[%c0_11, %c0_12] : memref<256x128xf32, #tpu.memory_space<vmem>>, vector<256x128xf32>
      tpu.vector_store %arg8[%c0_11, %c0_12], %12 {strides = array<i32>} : memref<256x128xf32, #tpu.memory_space<vmem>>, vector<256x128xf32>,
    } else {
    }
    %c0 = arith.constant 0 : index
    %c0_1 = arith.constant 0 : index
    %3 = vector.load %arg8[%c0, %c0_1] : memref<256x128xf32, #tpu.memory_space<vmem>>, vector<256x128xf32>
    %c0_2 = arith.constant 0 : index
    %c0_3 = arith.constant 0 : index
    %4 = vector.load %arg2[%c0_2, %c0_3] : memref<256x128xbf16, #tpu.memory_space<vmem>>, vector<256x128xbf16>
    %c0_4 = arith.constant 0 : index
    %c0_5 = arith.constant 0 : index
    %5 = vector.load %arg3[%c0_4, %c0_5] : memref<128x128xbf16, #tpu.memory_space<vmem>>, vector<128x128xbf16>
    %cst = arith.constant dense<0.000000e+00> : vector<256x128xf32>
    %6 = tpu.matmul %4, %5, %cst {dimension_numbers = #tpu.dot_dimension_numbers<[1], [0], [0], [1], [0, 0, 1, 1], [], []>} : vector<256x128xbf16>, vector<128x128xbf16>, vector<256x128xf32> -> vector<256x128xf32>
    %7 = arith.addf %3, %6 : vector<256x128xf32>
    %c0_6 = arith.constant 0 : index
    %c0_7 = arith.constant 0 : index
    %8 = vector.load %arg8[%c0_6, %c0_7] : memref<256x128xf32, #tpu.memory_space<vmem>>, vector<256x128xf32>
    tpu.vector_store %arg8[%c0_6, %c0_7], %7 {strides = array<i32>} : memref<256x128xf32, #tpu.memory_space<vmem>>, vector<256x128xf32>,
    %c0_i32_8 = arith.constant 0 : i32
    %9 = arith.cmpi eq, %arg1, %c0_i32_8 : i32
    %10 = arith.extui %9 : i1 to i32
    %c0_i32_9 = arith.constant 0 : i32
    %11 = arith.cmpi ne, %10, %c0_i32_9 : i32
    scf.if %11 {
      %c0_10 = arith.constant 0 : index
      %c0_11 = arith.constant 0 : index
      %12 = vector.load %arg8[%c0_10, %c0_11] : memref<256x128xf32, #tpu.memory_space<vmem>>, vector<256x128xf32>
      %c0_12 = arith.constant 0 : index
      %c0_13 = arith.constant 0 : index
      %13 = vector.load %arg4[%c0_12, %c0_13] : memref<1x128xf32, #tpu.memory_space<vmem>>, vector<1x128xf32>
      %14 = vector.broadcast %13 : vector<1x128xf32> to vector<256x128xf32>
      %15 = arith.addf %12, %14 : vector<256x128xf32>
      %c0_14 = arith.constant 0 : index
      %c0_15 = arith.constant 0 : index
      %16 = vector.load %arg5[%c0_14, %c0_15] : memref<256x128xf32, #tpu.memory_space<vmem>>, vector<256x128xf32>
      tpu.vector_store %arg5[%c0_14, %c0_15], %15 {strides = array<i32>} : memref<256x128xf32, #tpu.memory_space<vmem>>, vector<256x128xf32>,
      %cst_16 = arith.constant dense<0.000000e+00> : vector<128xf32>
      %17 = vector.multi_reduction <add>, %15, %cst_16 [0] : vector<256x128xf32> to vector<128xf32>
      %18 = vector.shape_cast %17 : vector<128xf32> to vector<1x1x128xf32>
      %19 = arith.mulf %15, %15 : vector<256x128xf32>
      %cst_17 = arith.constant dense<0.000000e+00> : vector<128xf32>
      %20 = vector.multi_reduction <add>, %19, %cst_17 [0] : vector<256x128xf32> to vector<128xf32>
      %21 = vector.shape_cast %20 : vector<128xf32> to vector<1x1x128xf32>
      %22 = vector.shape_cast %18 : vector<1x1x128xf32> to vector<1x1x128xf32>
      %23 = vector.broadcast %22 : vector<1x1x128xf32> to vector<1x8x128xf32>
      %c0_18 = arith.constant 0 : index
      %c0_19 = arith.constant 0 : index
      %c0_20 = arith.constant 0 : index
      %24 = vector.load %arg6[%c0_18, %c0_19, %c0_20] : memref<1x8x128xf32, #tpu.memory_space<vmem>>, vector<1x8x128xf32>
      tpu.vector_store %arg6[%c0_18, %c0_19, %c0_20], %23 {strides = array<i32>} : memref<1x8x128xf32, #tpu.memory_space<vmem>>, vector<1x8x128xf32>,
      %25 = vector.shape_cast %21 : vector<1x1x128xf32> to vector<1x1x128xf32>
      %26 = vector.broadcast %25 : vector<1x1x128xf32> to vector<1x8x128xf32>
      %c0_21 = arith.constant 0 : index
      %c0_22 = arith.constant 0 : index
      %c0_23 = arith.constant 0 : index
      %27 = vector.load %arg7[%c0_21, %c0_22, %c0_23] : memref<1x8x128xf32, #tpu.memory_space<vmem>>, vector<1x8x128xf32>
      tpu.vector_store %arg7[%c0_21, %c0_22, %c0_23], %26 {strides = array<i32>} : memref<1x8x128xf32, #tpu.memory_space<vmem>>, vector<1x8x128xf32>,
    } else {
    }
    return
  }
  func.func @transform_0(%arg0: i32, %arg1: i32) -> (i32, i32) {
    %c0_i32 = arith.constant 0 : i32
    return %arg0, %arg1 : i32, i32
  }
  func.func @transform_1(%arg0: i32, %arg1: i32) -> (i32, i32) {
    %c0_i32 = arith.constant 0 : i32
    %c0_i32_0 = arith.constant 0 : i32
    return %arg1, %c0_i32 : i32, i32
  }
  func.func @transform_2(%arg0: i32, %arg1: i32) -> (i32, i32) {
    %c0_i32 = arith.constant 0 : i32
    %c0_i32_0 = arith.constant 0 : i32
    %c0_i32_1 = arith.constant 0 : i32
    return %c0_i32, %c0_i32_0 : i32, i32
  }
  func.func @transform_3(%arg0: i32, %arg1: i32) -> (i32, i32) {
    %c0_i32 = arith.constant 0 : i32
    %c0_i32_0 = arith.constant 0 : i32
    return %arg0, %c0_i32 : i32, i32
  }
  func.func @transform_4(%arg0: i32, %arg1: i32) -> (i32, i32, i32) {
    %c0_i32 = arith.constant 0 : i32
    %c0_i32_0 = arith.constant 0 : i32
    %c0_i32_1 = arith.constant 0 : i32
    return %arg0, %c0_i32, %c0_i32_0 : i32, i32, i32
  }
  func.func @transform_5(%arg0: i32, %arg1: i32) -> (i32, i32, i32) {
    %c0_i32 = arith.constant 0 : i32
    %c0_i32_0 = arith.constant 0 : i32
    %c0_i32_1 = arith.constant 0 : i32
    return %arg0, %c0_i32, %c0_i32_0 : i32, i32, i32
  }
}

module attributes {stable_mosaic.version = 11 : i64} {
  func.func @bn_lrelu_pool_kernel(%arg0: i32, %arg1: memref<8x2x8x256xf32, #tpu.memory_space<vmem>>, %arg2: memref<1x256xf32, #tpu.memory_space<vmem>>, %arg3: memref<1x256xf32, #tpu.memory_space<vmem>>, %arg4: memref<8x8x128xf32, #tpu.memory_space<vmem>>) attributes {dimension_semantics = [#tpu.dimension_semantics<parallel>], iteration_bounds = array<i64: 2>, scalar_prefetch = 0 : i64, scratch_operands = 0 : i64, tpu.core_type = #tpu.core_type<tc>, window_params = [{transform_indices = @transform_0, window_bounds = array<i64: 8, 2, 8, 256>}, {pipeline_mode = #tpu.pipeline_mode<synchronous>, transform_indices = @transform_1, window_bounds = array<i64: 1, 256>}, {pipeline_mode = #tpu.pipeline_mode<synchronous>, transform_indices = @transform_2, window_bounds = array<i64: 1, 256>}, {transform_indices = @transform_3, window_bounds = array<i64: 8, 8, 128>}]} {
    %c0 = arith.constant 0 : index
    %c0_0 = arith.constant 0 : index
    %c0_1 = arith.constant 0 : index
    %c0_2 = arith.constant 0 : index
    %0 = vector.load %arg1[%c0, %c0_0, %c0_1, %c0_2] : memref<8x2x8x256xf32, #tpu.memory_space<vmem>>, vector<8x1x8x256xf32>
    %1 = vector.shape_cast %0 : vector<8x1x8x256xf32> to vector<8x8x256xf32>
    %c0_3 = arith.constant 0 : index
    %c0_4 = arith.constant 0 : index
    %2 = vector.load %arg2[%c0_3, %c0_4] : memref<1x256xf32, #tpu.memory_space<vmem>>, vector<1x256xf32>
    %3 = vector.shape_cast %2 : vector<1x256xf32> to vector<1x1x256xf32>
    %4 = vector.broadcast %3 : vector<1x1x256xf32> to vector<8x8x256xf32>
    %5 = arith.mulf %1, %4 : vector<8x8x256xf32>
    %c0_5 = arith.constant 0 : index
    %c0_6 = arith.constant 0 : index
    %6 = vector.load %arg3[%c0_5, %c0_6] : memref<1x256xf32, #tpu.memory_space<vmem>>, vector<1x256xf32>
    %7 = vector.shape_cast %6 : vector<1x256xf32> to vector<1x1x256xf32>
    %8 = vector.broadcast %7 : vector<1x1x256xf32> to vector<8x8x256xf32>
    %9 = arith.addf %5, %8 : vector<8x8x256xf32>
    %cst = arith.constant 0.000000e+00 : f32
    %10 = vector.broadcast %cst : f32 to vector<8x8x256xf32>
    %11 = arith.cmpf oge, %9, %10 : vector<8x8x256xf32>
    %cst_7 = arith.constant 1.000000e-01 : f32
    %12 = vector.broadcast %cst_7 : f32 to vector<8x8x256xf32>
    %13 = arith.mulf %12, %9 : vector<8x8x256xf32>
    %14 = arith.select %11, %9, %13 : vector<8x8x256xi1>, vector<8x8x256xf32>
    %c0_8 = arith.constant 0 : index
    %c1 = arith.constant 1 : index
    %c0_9 = arith.constant 0 : index
    %c0_10 = arith.constant 0 : index
    %15 = vector.load %arg1[%c0_8, %c1, %c0_9, %c0_10] : memref<8x2x8x256xf32, #tpu.memory_space<vmem>>, vector<8x1x8x256xf32>
    %16 = vector.shape_cast %15 : vector<8x1x8x256xf32> to vector<8x8x256xf32>
    %c0_11 = arith.constant 0 : index
    %c0_12 = arith.constant 0 : index
    %17 = vector.load %arg2[%c0_11, %c0_12] : memref<1x256xf32, #tpu.memory_space<vmem>>, vector<1x256xf32>
    %18 = vector.shape_cast %17 : vector<1x256xf32> to vector<1x1x256xf32>
    %19 = vector.broadcast %18 : vector<1x1x256xf32> to vector<8x8x256xf32>
    %20 = arith.mulf %16, %19 : vector<8x8x256xf32>
    %c0_13 = arith.constant 0 : index
    %c0_14 = arith.constant 0 : index
    %21 = vector.load %arg3[%c0_13, %c0_14] : memref<1x256xf32, #tpu.memory_space<vmem>>, vector<1x256xf32>
    %22 = vector.shape_cast %21 : vector<1x256xf32> to vector<1x1x256xf32>
    %23 = vector.broadcast %22 : vector<1x1x256xf32> to vector<8x8x256xf32>
    %24 = arith.addf %20, %23 : vector<8x8x256xf32>
    %cst_15 = arith.constant 0.000000e+00 : f32
    %25 = vector.broadcast %cst_15 : f32 to vector<8x8x256xf32>
    %26 = arith.cmpf oge, %24, %25 : vector<8x8x256xf32>
    %cst_16 = arith.constant 1.000000e-01 : f32
    %27 = vector.broadcast %cst_16 : f32 to vector<8x8x256xf32>
    %28 = arith.mulf %27, %24 : vector<8x8x256xf32>
    %29 = arith.select %26, %24, %28 : vector<8x8x256xi1>, vector<8x8x256xf32>
    %30 = arith.maximumf %14, %29 : vector<8x8x256xf32>
    %31 = vector.extract_strided_slice %30 {offsets = [0, 0, 0], sizes = [8, 8, 128], strides = [1, 1, 1]} : vector<8x8x256xf32> to vector<8x8x128xf32>
    %32 = vector.extract_strided_slice %30 {offsets = [0, 0, 128], sizes = [8, 8, 128], strides = [1, 1, 1]} : vector<8x8x256xf32> to vector<8x8x128xf32>
    %33 = arith.maximumf %31, %32 : vector<8x8x128xf32>
    %c0_17 = arith.constant 0 : index
    %c0_18 = arith.constant 0 : index
    %c0_19 = arith.constant 0 : index
    %34 = vector.load %arg4[%c0_17, %c0_18, %c0_19] : memref<8x8x128xf32, #tpu.memory_space<vmem>>, vector<8x8x128xf32>
    tpu.vector_store %arg4[%c0_17, %c0_18, %c0_19], %33 {strides = array<i32>} : memref<8x8x128xf32, #tpu.memory_space<vmem>>, vector<8x8x128xf32>,
    return
  }
  func.func @transform_0(%arg0: i32) -> (i32, i32, i32, i32) {
    %c0_i32 = arith.constant 0 : i32
    %c0_i32_0 = arith.constant 0 : i32
    %c0_i32_1 = arith.constant 0 : i32
    %c0_i32_2 = arith.constant 0 : i32
    return %arg0, %c0_i32, %c0_i32_0, %c0_i32_1 : i32, i32, i32, i32
  }
  func.func @transform_1(%arg0: i32) -> (i32, i32) {
    %c0_i32 = arith.constant 0 : i32
    %c0_i32_0 = arith.constant 0 : i32
    %c0_i32_1 = arith.constant 0 : i32
    return %c0_i32, %c0_i32_0 : i32, i32
  }
  func.func @transform_2(%arg0: i32) -> (i32, i32) {
    %c0_i32 = arith.constant 0 : i32
    %c0_i32_0 = arith.constant 0 : i32
    %c0_i32_1 = arith.constant 0 : i32
    return %c0_i32, %c0_i32_0 : i32, i32
  }
  func.func @transform_3(%arg0: i32) -> (i32, i32, i32) {
    %c0_i32 = arith.constant 0 : i32
    %c0_i32_0 = arith.constant 0 : i32
    %c0_i32_1 = arith.constant 0 : i32
    return %arg0, %c0_i32, %c0_i32_0 : i32, i32, i32
  }
}

</mosaic_0001>

<llo_original>
// kernel: tile.13
$region0: #{tile.13}
  #allocation0 [shape = 's32[1]{0}', space=sflag, size = 0x4, scoped, tag = 'scoped memory for tile.13']
  %s0 = inlined_call_operand.vmem [shape: f32[128], index: 0, kind: input, shape index: {}]
  %s1 = inlined_call_operand.vmem [shape: f32[2,128], index: 1, kind: output, shape index: {}]
  // Predicated region
  $region2: #{tile.13} parent=0 // pred_check
    _
  $region3: #{tile.13} parent=0 // pred_check_branch
    %3 = sbr.rel (0) target = $region5
  $region4: #{tile.13} parent=0 // pred_region
    _
  $region5: #{tile.13} parent=0 // pred_fallthru
    _
  %v4 = vld [vmem:[%s0] ss:$0 sm:$0xff]
  %5 = vst [vmem:[%s1] sm:$0x3] %v4

// kernel: cnn_block_forward.3
$region0: #{cnn_block_forward.3}
  #allocation0 [shape = 'u32[]', space=smem, size = 0x4, offset = 0x4, fixed_abs, tag = 'smem constant byte address 0x4 - core index']
  #allocation1 [shape = 'u32[72,128]{1,0:T(1,128)}', space=vmem, size = 0x9000, scoped, tag = 'internal scratch']
  %s0 = inlined_call_operand.vmem [shape: f32[16,2,8,256], index: 0, kind: input, shape index: {}]
  %s1 = inlined_call_operand.vmem [shape: f32[1,256], index: 1, kind: input, shape index: {}]
  %s2 = inlined_call_operand.vmem [shape: f32[1,256], index: 2, kind: input, shape index: {}]
  %s3 = inlined_call_operand.vmem [shape: f32[16,8,128], index: 3, kind: output, shape index: {}]
  %s4 = sld [smem:[#allocation0]]
  $region45: #{cnn_block_forward.3} parent=0
    _
  %s6 = ssub.s32 1, %s4
  %s7 = scalar_select 0, %s6, %s4
  loop: start=0, step=1, limit=4
  $region2: #{cnn_block_forward.3} parent=0 // loop_pre_header
    _
  $region3: #{cnn_block_forward.3} parent=0 // loop_header
    %s9 = sphi 0, %s13
    %p10 = scmp.ge.s32.totalorder %s9, 4
    %s19 = sphi 0, %s21
    %s22 = sphi 0, %s19
    %s23 = sphi 0, %s22
    %s39 = sphi 0, %s23
    %s43 = sphi 0, %s43
    %s45 = sphi 0, %s43
    %s46 = sphi 0, %s45
    %s60 = sphi 0, %s46
    %s64 = sphi 0, %s64
    %s66 = sphi 0, %s64
    %s67 = sphi 0, %s66
    %s81 = sphi 0, %s67
    %s87 = sphi 0, %s89
    %s90 = sphi 0, %s87
    %s91 = sphi 0, %s90
    %s107 = sphi 0, %s91
  $region4: #{cnn_block_forward.3} parent=0 // loop_header_branch
    %12 = sbr.rel (%p10) target = $region8
  $region5: #{cnn_block_forward.3} parent=0 // loop_body
    %s14 = ssub.s32 %s9, 1
    %s15 = ssub.s32 %s9, 2
    %s16 = sadd.s32 %s9, 1
    %s17 = ssub.s32 %s9, %s16
    %p18 = scmp.eq.s32.totalorder %s17, 0
    %s20 = sadd.s32 %s19, 1
    %s21 = scalar_select %p18, %s19, %s20
    %p24 = pneg %p18
    %p25 = scmp.eq.s32.totalorder %s9, 1
    %p26 = por %p24, %p25
    %p27 = scmp.ne.s32.totalorder %s19, %s22
    %p28 = scmp.eq.s32.totalorder %s9, 0
    %p29 = por %p27, %p28
    %p30 = scmp.ne.s32.totalorder %s19, %s22
    %p31 = scmp.eq.s32.totalorder %s14, 1
    %p32 = por %p30, %p31
    %p33 = scmp.ne.s32.totalorder %s22, %s23
    %p34 = scmp.eq.s32.totalorder %s14, 0
    %p35 = por %p33, %p34
    %p36 = scmp.ne.s32.totalorder %s22, %s23
    %p37 = scmp.eq.s32.totalorder %s15, 1
    %p38 = por %p36, %p37
    %p40 = scmp.ne.s32.totalorder %s23, %s39
    %p41 = scmp.eq.s32.totalorder %s15, 0
    %p42 = por %p40, %p41
    %s44 = sadd.s32 %s43, 1
    %p47 = scmp.eq.s32.totalorder %s9, 1
    %p48 = scmp.ne.s32.totalorder %s43, %s45
    %p49 = scmp.eq.s32.totalorder %s9, 0
    %p50 = por %p48, %p49
    %p51 = scmp.ne.s32.totalorder %s43, %s45
    %p52 = scmp.eq.s32.totalorder %s14, 1
    %p53 = por %p51, %p52
    %p54 = scmp.ne.s32.totalorder %s45, %s46
    %p55 = scmp.eq.s32.totalorder %s14, 0
    %p56 = por %p54, %p55
    %p57 = scmp.ne.s32.totalorder %s45, %s46
    %p58 = scmp.eq.s32.totalorder %s15, 1
    %p59 = por %p57, %p58
    %p61 = scmp.ne.s32.totalorder %s46, %s60
    %p62 = scmp.eq.s32.totalorder %s15, 0
    %p63 = por %p61, %p62
    %s65 = sadd.s32 %s64, 1
    %p68 = scmp.eq.s32.totalorder %s9, 1
    %p69 = scmp.ne.s32.totalorder %s64, %s66
    %p70 = scmp.eq.s32.totalorder %s9, 0
    %p71 = por %p69, %p70
    %p72 = scmp.ne.s32.totalorder %s64, %s66
    %p73 = scmp.eq.s32.totalorder %s14, 1
    %p74 = por %p72, %p73
    %p75 = scmp.ne.s32.totalorder %s66, %s67
    %p76 = scmp.eq.s32.totalorder %s14, 0
    %p77 = por %p75, %p76
    %p78 = scmp.ne.s32.totalorder %s66, %s67
    %p79 = scmp.eq.s32.totalorder %s15, 1
    %p80 = por %p78, %p79
    %p82 = scmp.ne.s32.totalorder %s67, %s81
    %p83 = scmp.eq.s32.totalorder %s15, 0
    %p84 = por %p82, %p83
    %s85 = ssub.s32 %s9, %s16
    %p86 = scmp.eq.s32.totalorder %s85, 0
    %s88 = sadd.s32 %s87, 1
    %s89 = scalar_select %p86, %s87, %s88
    %p92 = pneg %p86
    %p93 = scmp.eq.s32.totalorder %s9, 1
    %p94 = por %p92, %p93
    %p95 = scmp.ne.s32.totalorder %s87, %s90
    %p96 = scmp.eq.s32.totalorder %s9, 0
    %p97 = por %p95, %p96
    %p98 = scmp.ne.s32.totalorder %s87, %s90
    %p99 = scmp.eq.s32.totalorder %s14, 1
    %p100 = por %p98, %p99
    %p101 = scmp.ne.s32.totalorder %s90, %s91
    %p102 = scmp.eq.s32.totalorder %s14, 0
    %p103 = por %p101, %p102
    %p104 = scmp.ne.s32.totalorder %s90, %s91
    %p105 = scmp.eq.s32.totalorder %s15, 1
    %p106 = por %p104, %p105
    %p108 = scmp.ne.s32.totalorder %s91, %s107
    %p109 = scmp.eq.s32.totalorder %s15, 0
    %p110 = por %p108, %p109
    %p111 = scmp.le.s32.totalorder 1, %s9
    %p112 = scmp.lt.s32.totalorder %s9, 3
    %p113 = pnand %p111, %p112
    %p114 = pneg %p113
    // Predicated region
    $region9: #{cnn_block_forward.3} parent=5 // pred_check
      _
    $region10: #{cnn_block_forward.3} parent=5 // pred_check_branch
      %116 = sbr.rel (%p113) target = $region12
    $region11: #{cnn_block_forward.3} parent=5 // pred_region
      %s117 = ssub.s32 %s9, 1
      // Predicated region
      $region13: #{cnn_block_forward.3} parent=11 // pred_check
        %p118 = pneg %p56
      $region14: #{cnn_block_forward.3} parent=11 // pred_check_branch
        %120 = sbr.rel (%p118) target = $region16
      $region15: #{cnn_block_forward.3} parent=11 // pred_region
        _
      $region16: #{cnn_block_forward.3} parent=11 // pred_fallthru
        _
      // Predicated region
      $region17: #{cnn_block_forward.3} parent=11 // pred_check
        %p121 = pneg %p77
      $region18: #{cnn_block_forward.3} parent=11 // pred_check_branch
        %123 = sbr.rel (%p121) target = $region20
      $region19: #{cnn_block_forward.3} parent=11 // pred_region
        _
      $region20: #{cnn_block_forward.3} parent=11 // pred_fallthru
        _
    $region12: #{cnn_block_forward.3} parent=5 // pred_fallthru
      _
    %p124 = scmp.lt.s32.totalorder %s9, 2
    // Predicated region
    $region21: #{cnn_block_forward.3} parent=5 // pred_check
      %p125 = pneg %p124
    $region22: #{cnn_block_forward.3} parent=5 // pred_check_branch
      %127 = sbr.rel (%p125) target = $region24
    $region23: #{cnn_block_forward.3} parent=5 // pred_region
      // Predicated region
      $region25: #{cnn_block_forward.3} parent=23 // pred_check
        %p128 = pneg %p29
      $region26: #{cnn_block_forward.3} parent=23 // pred_check_branch
        %130 = sbr.rel (%p128) target = $region28
      $region27: #{cnn_block_forward.3} parent=23 // pred_region
        %s131 = smul.u32 8, %s9
        %p132 = scmp.lt.s32.totalorder %s131, 15
        %s133 = scalar_select %p132, %s131, 15
        %s134 = smul.addr %s133, 4
        %s135 = smul.addr %s134, 8
        %s136 = scalar_lea.vmem %s0, %s135
        %s137 = smul.u32 8, %s9
      $region28: #{cnn_block_forward.3} parent=23 // pred_fallthru
        _
    $region24: #{cnn_block_forward.3} parent=5 // pred_fallthru
      _
    %p138 = scmp.le.s32.totalorder 1, %s9
    %p139 = scmp.lt.s32.totalorder %s9, 3
    %p140 = pnand %p138, %p139
    %p141 = pneg %p140
    // Predicated region
    $region29: #{cnn_block_forward.3} parent=5 // pred_check
      _
    $region30: #{cnn_block_forward.3} parent=5 // pred_check_branch
      %143 = sbr.rel (%p140) target = $region32
    $region31: #{cnn_block_forward.3} parent=5 // pred_region
      %s144 = ssub.s32 %s9, 1
      %s145 = smul.u32 8, %s14
      %p146 = scmp.lt.s32.totalorder %s145, 15
      %s147 = scalar_select %p146, %s145, 15
      %s148 = smul.addr %s147, 4
      %s149 = smul.addr %s148, 8
      %s150 = scalar_lea.vmem %s0, %s149
      %p151 = pneg %p35
      %p152 = pneg %p32
      %p153 = pneg %p56
      %p154 = pneg %p53
      %p155 = pneg %p77
      %p156 = pneg %p74
      %p157 = pneg %p103
      %p158 = pneg %p100
      %s159 = smul.u32 8, %s14
      %p160 = scmp.lt.s32.totalorder %s159, 15
      %s161 = scalar_select %p160, %s159, 15
      %s162 = smul.addr %s161, 8
      %s163 = scalar_lea.vmem %s3, %s162
      %s164 = smul.u32 8, %s14
      %p165 = scmp.lt.s32.totalorder %s164, 15
      %s166 = scalar_select %p165, %s164, 15
      %s167 = smul.addr %s166, 4
      %s168 = smul.addr %s167, 8
      %s169 = scalar_lea.vmem %s0, %s168
      %s170 = smul.u32 8, %s14
      %s171 = smul.u32 8, %s14
      %p172 = scmp.lt.s32.totalorder %s171, 15
      %s173 = scalar_select %p172, %s171, 15
      %s174 = smul.addr %s173, 8
      %s175 = scalar_lea.vmem %s3, %s174
      %s176 = smul.u32 8, %s14
      %v177 = vld [vmem:[%s169] sm:$0xff]
      %v178 = vld [vmem:[%s169 + $0x8] sm:$0xff]
      %v179 = vld [vmem:[%s169 + $0x20] sm:$0xff]
      %v180 = vld [vmem:[%s169 + $0x28] sm:$0xff]
      %v181 = vld [vmem:[%s169 + $0x40] sm:$0xff]
      %v182 = vld [vmem:[%s169 + $0x48] sm:$0xff]
      %v183 = vld [vmem:[%s169 + $0x60] sm:$0xff]
      %v184 = vld [vmem:[%s169 + $0x68] sm:$0xff]
      %v185 = vld [vmem:[%s169 + $0x80] sm:$0xff]
      %v186 = vld [vmem:[%s169 + $0x88] sm:$0xff]
      %v187 = vld [vmem:[%s169 + $0xa0] sm:$0xff]
      %v188 = vld [vmem:[%s169 + $0xa8] sm:$0xff]
      %v189 = vld [vmem:[%s169 + $0xc0] sm:$0xff]
      %v190 = vld [vmem:[%s169 + $0xc8] sm:$0xff]
      %v191 = vld [vmem:[%s169 + $0xe0] sm:$0xff]
      %v192 = vld [vmem:[%s169 + $0xe8] sm:$0xff]
      %v193 = vld [vmem:[%s1] sm:$0x3]
      %v195 = vperm.slane %v193, 0
      %v196 = vperm.slane %v193, 1
      %v199 = vmul.f32 %v177, %v195
      %v200 = vmul.f32 %v178, %v196
      %v201 = vmul.f32 %v179, %v195
      %v202 = vmul.f32 %v180, %v196
      %v203 = vmul.f32 %v181, %v195
      %v204 = vmul.f32 %v182, %v196
      %v205 = vmul.f32 %v183, %v195
      %v206 = vmul.f32 %v184, %v196
      %v207 = vmul.f32 %v185, %v195
      %v208 = vmul.f32 %v186, %v196
      %v209 = vmul.f32 %v187, %v195
      %v210 = vmul.f32 %v188, %v196
      %v211 = vmul.f32 %v189, %v195
      %v212 = vmul.f32 %v190, %v196
      %v213 = vmul.f32 %v191, %v195
      %v214 = vmul.f32 %v192, %v196
      %v215 = vld [vmem:[%s2] sm:$0x3]
      %v217 = vperm.slane %v215, 0
      %v218 = vperm.slane %v215, 1
      %v221 = vadd.f32 %v199, %v217
      %v222 = vadd.f32 %v200, %v218
      %v223 = vadd.f32 %v201, %v217
      %v224 = vadd.f32 %v202, %v218
      %v225 = vadd.f32 %v203, %v217
      %v226 = vadd.f32 %v204, %v218
      %v227 = vadd.f32 %v205, %v217
      %v228 = vadd.f32 %v206, %v218
      %v229 = vadd.f32 %v207, %v217
      %v230 = vadd.f32 %v208, %v218
      %v231 = vadd.f32 %v209, %v217
      %v232 = vadd.f32 %v210, %v218
      %v233 = vadd.f32 %v211, %v217
      %v234 = vadd.f32 %v212, %v218
      %v235 = vadd.f32 %v213, %v217
      %v236 = vadd.f32 %v214, %v218
      %vm237 = vcmp.ge.f32.partialorder %v221, 0.0
      %vm238 = vcmp.ge.f32.partialorder %v222, 0.0
      %vm239 = vcmp.ge.f32.partialorder %v223, 0.0
      %vm240 = vcmp.ge.f32.partialorder %v224, 0.0
      %vm241 = vcmp.ge.f32.partialorder %v225, 0.0
      %vm242 = vcmp.ge.f32.partialorder %v226, 0.0
      %vm243 = vcmp.ge.f32.partialorder %v227, 0.0
      %vm244 = vcmp.ge.f32.partialorder %v228, 0.0
      %vm245 = vcmp.ge.f32.partialorder %v229, 0.0
      %vm246 = vcmp.ge.f32.partialorder %v230, 0.0
      %vm247 = vcmp.ge.f32.partialorder %v231, 0.0
      %vm248 = vcmp.ge.f32.partialorder %v232, 0.0
      %vm249 = vcmp.ge.f32.partialorder %v233, 0.0
      %vm250 = vcmp.ge.f32.partialorder %v234, 0.0
      %vm251 = vcmp.ge.f32.partialorder %v235, 0.0
      %vm252 = vcmp.ge.f32.partialorder %v236, 0.0
      %v253 = vmul.f32 %v221, 0.1
      %v254 = vmul.f32 %v222, 0.1
      %v255 = vmul.f32 %v223, 0.1
      %v256 = vmul.f32 %v224, 0.1
      %v257 = vmul.f32 %v225, 0.1
      %v258 = vmul.f32 %v226, 0.1
      %v259 = vmul.f32 %v227, 0.1
      %v260 = vmul.f32 %v228, 0.1
      %v261 = vmul.f32 %v229, 0.1
      %v262 = vmul.f32 %v230, 0.1
      %v263 = vmul.f32 %v231, 0.1
      %v264 = vmul.f32 %v232, 0.1
      %v265 = vmul.f32 %v233, 0.1
      %v266 = vmul.f32 %v234, 0.1
      %v267 = vmul.f32 %v235, 0.1
      %v268 = vmul.f32 %v236, 0.1
      %v269 = vsel %vm237, %v221, %v253
      %v270 = vsel %vm238, %v222, %v254
      %v271 = vsel %vm239, %v223, %v255
      %v272 = vsel %vm240, %v224, %v256
      %v273 = vsel %vm241, %v225, %v257
      %v274 = vsel %vm242, %v226, %v258
      %v275 = vsel %vm243, %v227, %v259
      %v276 = vsel %vm244, %v228, %v260
      %v277 = vsel %vm245, %v229, %v261
      %v278 = vsel %vm246, %v230, %v262
      %v279 = vsel %vm247, %v231, %v263
      %v280 = vsel %vm248, %v232, %v264
      %v281 = vsel %vm249, %v233, %v265
      %v282 = vsel %vm250, %v234, %v266
      %v283 = vsel %vm251, %v235, %v267
      %v284 = vsel %vm252, %v236, %v268
      %s285 = scalar_lea.vmem %s169, 16
      %v286 = vld [vmem:[%s285] sm:$0xff]
      %v287 = vld [vmem:[%s285 + $0x8] sm:$0xff]
      %v288 = vld [vmem:[%s285 + $0x20] sm:$0xff]
      %v289 = vld [vmem:[%s285 + $0x28] sm:$0xff]
      %v290 = vld [vmem:[%s285 + $0x40] sm:$0xff]
      %v291 = vld [vmem:[%s285 + $0x48] sm:$0xff]
      %v292 = vld [vmem:[%s285 + $0x60] sm:$0xff]
      %v293 = vld [vmem:[%s285 + $0x68] sm:$0xff]
      %v294 = vld [vmem:[%s285 + $0x80] sm:$0xff]
      %v295 = vld [vmem:[%s285 + $0x88] sm:$0xff]
      %v296 = vld [vmem:[%s285 + $0xa0] sm:$0xff]
      %v297 = vld [vmem:[%s285 + $0xa8] sm:$0xff]
      %v298 = vld [vmem:[%s285 + $0xc0] sm:$0xff]
      %v299 = vld [vmem:[%s285 + $0xc8] sm:$0xff]
      %v300 = vld [vmem:[%s285 + $0xe0] sm:$0xff]
      %v301 = vld [vmem:[%s285 + $0xe8] sm:$0xff]
      %v302 = vmul.f32 %v286, %v195
      %v303 = vmul.f32 %v287, %v196
      %v304 = vmul.f32 %v288, %v195
      %v305 = vmul.f32 %v289, %v196
      %v306 = vmul.f32 %v290, %v195
      %v307 = vmul.f32 %v291, %v196
      %v308 = vmul.f32 %v292, %v195
      %v309 = vmul.f32 %v293, %v196
      %v310 = vmul.f32 %v294, %v195
      %v311 = vmul.f32 %v295, %v196
      %v312 = vmul.f32 %v296, %v195
      %v313 = vmul.f32 %v297, %v196
      %v314 = vmul.f32 %v298, %v195
      %v315 = vmul.f32 %v299, %v196
      %v316 = vmul.f32 %v300, %v195
      %v317 = vmul.f32 %v301, %v196
      %v318 = vadd.f32 %v302, %v217
      %v319 = vadd.f32 %v303, %v218
      %v320 = vadd.f32 %v304, %v217
      %v321 = vadd.f32 %v305, %v218
      %v322 = vadd.f32 %v306, %v217
      %v323 = vadd.f32 %v307, %v218
      %v324 = vadd.f32 %v308, %v217
      %v325 = vadd.f32 %v309, %v218
      %v326 = vadd.f32 %v310, %v217
      %v327 = vadd.f32 %v311, %v218
      %v328 = vadd.f32 %v312, %v217
      %v329 = vadd.f32 %v313, %v218
      %v330 = vadd.f32 %v314, %v217
      %v331 = vadd.f32 %v315, %v218
      %v332 = vadd.f32 %v316, %v217
      %v333 = vadd.f32 %v317, %v218
      %vm334 = vcmp.ge.f32.partialorder %v318, 0.0
      %vm335 = vcmp.ge.f32.partialorder %v319, 0.0
      %vm336 = vcmp.ge.f32.partialorder %v320, 0.0
      %vm337 = vcmp.ge.f32.partialorder %v321, 0.0
      %vm338 = vcmp.ge.f32.partialorder %v322, 0.0
      %vm339 = vcmp.ge.f32.partialorder %v323, 0.0
      %vm340 = vcmp.ge.f32.partialorder %v324, 0.0
      %vm341 = vcmp.ge.f32.partialorder %v325, 0.0
      %vm342 = vcmp.ge.f32.partialorder %v326, 0.0
      %vm343 = vcmp.ge.f32.partialorder %v327, 0.0
      %vm344 = vcmp.ge.f32.partialorder %v328, 0.0
      %vm345 = vcmp.ge.f32.partialorder %v329, 0.0
      %vm346 = vcmp.ge.f32.partialorder %v330, 0.0
      %vm347 = vcmp.ge.f32.partialorder %v331, 0.0
      %vm348 = vcmp.ge.f32.partialorder %v332, 0.0
      %vm349 = vcmp.ge.f32.partialorder %v333, 0.0
      %v350 = vmul.f32 %v318, 0.1
      %v351 = vmul.f32 %v319, 0.1
      %v352 = vmul.f32 %v320, 0.1
      %v353 = vmul.f32 %v321, 0.1
      %v354 = vmul.f32 %v322, 0.1
      %v355 = vmul.f32 %v323, 0.1
      %v356 = vmul.f32 %v324, 0.1
      %v357 = vmul.f32 %v325, 0.1
      %v358 = vmul.f32 %v326, 0.1
      %v359 = vmul.f32 %v327, 0.1
      %v360 = vmul.f32 %v328, 0.1
      %v361 = vmul.f32 %v329, 0.1
      %v362 = vmul.f32 %v330, 0.1
      %v363 = vmul.f32 %v331, 0.1
      %v364 = vmul.f32 %v332, 0.1
      %v365 = vmul.f32 %v333, 0.1
      %v366 = vsel %vm334, %v318, %v350
      %v367 = vsel %vm335, %v319, %v351
      %v368 = vsel %vm336, %v320, %v352
      %v369 = vsel %vm337, %v321, %v353
      %v370 = vsel %vm338, %v322, %v354
      %v371 = vsel %vm339, %v323, %v355
      %v372 = vsel %vm340, %v324, %v356
      %v373 = vsel %vm341, %v325, %v357
      %v374 = vsel %vm342, %v326, %v358
      %v375 = vsel %vm343, %v327, %v359
      %v376 = vsel %vm344, %v328, %v360
      %v377 = vsel %vm345, %v329, %v361
      %v378 = vsel %vm346, %v330, %v362
      %v379 = vsel %vm347, %v331, %v363
      %v380 = vsel %vm348, %v332, %v364
      %v381 = vsel %vm349, %v333, %v365
      %v382 = vmax.f32 %v269, %v366
      %v383 = vmax.f32 %v270, %v367
      %v384 = vmax.f32 %v271, %v368
      %v385 = vmax.f32 %v272, %v369
      %v386 = vmax.f32 %v273, %v370
      %v387 = vmax.f32 %v274, %v371
      %v388 = vmax.f32 %v275, %v372
      %v389 = vmax.f32 %v276, %v373
      %v390 = vmax.f32 %v277, %v374
      %v391 = vmax.f32 %v278, %v375
      %v392 = vmax.f32 %v279, %v376
      %v393 = vmax.f32 %v280, %v377
      %v394 = vmax.f32 %v281, %v378
      %v395 = vmax.f32 %v282, %v379
      %v396 = vmax.f32 %v283, %v380
      %v397 = vmax.f32 %v284, %v381
      %v398 = vmax.f32 %v382, %v383
      %v399 = vmax.f32 %v384, %v385
      %v400 = vmax.f32 %v386, %v387
      %v401 = vmax.f32 %v388, %v389
      %v402 = vmax.f32 %v390, %v391
      %v403 = vmax.f32 %v392, %v393
      %v404 = vmax.f32 %v394, %v395
      %v405 = vmax.f32 %v396, %v397
      %406 = vst [vmem:[%s175] sm:$0xff] %v398
      %407 = vst [vmem:[%s175 + $0x8] sm:$0xff] %v399
      %408 = vst [vmem:[%s175 + $0x10] sm:$0xff] %v400
      %409 = vst [vmem:[%s175 + $0x18] sm:$0xff] %v401
      %410 = vst [vmem:[%s175 + $0x20] sm:$0xff] %v402
      %411 = vst [vmem:[%s175 + $0x28] sm:$0xff] %v403
      %412 = vst [vmem:[%s175 + $0x30] sm:$0xff] %v404
      %413 = vst [vmem:[%s175 + $0x38] sm:$0xff] %v405
      %s414 = smul.u32 8, %s14
      %p415 = scmp.lt.s32.totalorder %s414, 15
      %s416 = scalar_select %p415, %s414, 15
      %s417 = smul.addr %s416, 8
      %s418 = scalar_lea.vmem %s3, %s417
      // Predicated region
      $region33: #{cnn_block_forward.3} parent=31 // pred_check
        %p419 = pneg %p100
      $region34: #{cnn_block_forward.3} parent=31 // pred_check_branch
        %421 = sbr.rel (%p419) target = $region36
      $region35: #{cnn_block_forward.3} parent=31 // pred_region
        %s422 = smul.u32 8, %s14
      $region36: #{cnn_block_forward.3} parent=31 // pred_fallthru
        _
    $region32: #{cnn_block_forward.3} parent=5 // pred_fallthru
      _
    %p423 = scmp.le.s32.totalorder 2, %s9
    // Predicated region
    $region37: #{cnn_block_forward.3} parent=5 // pred_check
      %p424 = pneg %p423
    $region38: #{cnn_block_forward.3} parent=5 // pred_check_branch
      %426 = sbr.rel (%p424) target = $region40
    $region39: #{cnn_block_forward.3} parent=5 // pred_region
      %s427 = ssub.s32 %s9, 2
      // Predicated region
      $region41: #{cnn_block_forward.3} parent=39 // pred_check
        %p428 = pneg %p106
      $region42: #{cnn_block_forward.3} parent=39 // pred_check_branch
        %430 = sbr.rel (%p428) target = $region44
      $region43: #{cnn_block_forward.3} parent=39 // pred_region
        %s431 = smul.u32 8, %s15
        %p432 = scmp.lt.s32.totalorder %s431, 15
        %s433 = scalar_select %p432, %s431, 15
        %s434 = smul.addr %s433, 8
        %s435 = scalar_lea.vmem %s3, %s434
      $region44: #{cnn_block_forward.3} parent=39 // pred_fallthru
        _
    $region40: #{cnn_block_forward.3} parent=5 // pred_fallthru
      _
  $region6: #{cnn_block_forward.3} parent=0 // loop_footer
    %s13 = sadd.s32 1, %s9
  $region7: #{cnn_block_forward.3} parent=0 // loop_footer_branch
    %8 = sbr.rel target = $region3
  $region8: #{cnn_block_forward.3} parent=0 // loop_exit
    _

// kernel: cnn_block_forward.2
$region0: #{cnn_block_forward.2}
  #allocation0 [shape = 'u32[]', space=smem, size = 0x4, offset = 0x4, fixed_abs, tag = 'smem constant byte address 0x4 - core index']
  #allocation1 [shape = 'u32[72,128]{1,0:T(1,128)}', space=vmem, size = 0x9000, scoped, tag = 'internal scratch']
  #allocation2 [shape = 'f32[256,128]{1,0:T(8,128)}', space=vmem, size = 0x20000, scoped, tag = 'scratch operand']
  %s0 = inlined_call_operand.vmem [shape: bf16[512,128], index: 0, kind: input, shape index: {}]
  %s1 = inlined_call_operand.vmem [shape: bf16[128,128], index: 1, kind: input, shape index: {}]
  %s2 = inlined_call_operand.vmem [shape: f32[1,128], index: 2, kind: input, shape index: {}]
  %s3 = inlined_call_operand.vmem [shape: f32[512,128], index: 3, kind: output, shape index: {0}]
  %s4 = inlined_call_operand.vmem [shape: f32[2,8,128], index: 4, kind: output, shape index: {1}]
  %s5 = inlined_call_operand.vmem [shape: f32[2,8,128], index: 5, kind: output, shape index: {2}]
  %6 = xla_tuple %s3, %s4, %s5
  %s7 = sld [smem:[#allocation0]]
  $region69: #{cnn_block_forward.2} parent=0
    _
  %s9 = ssub.s32 1, %s7
  %s10 = scalar_select 0, %s9, %s7
  loop: start=0, step=1, limit=4
  $region2: #{cnn_block_forward.2} parent=0 // loop_pre_header
    _
  $region3: #{cnn_block_forward.2} parent=0 // loop_header
    %s12 = sphi 0, %s16
    %p13 = scmp.ge.s32.totalorder %s12, 4
    %s19 = sphi 0, %s31
    %s20 = sphi 0, %s27
    %s21 = sphi 0, %s19
    %s22 = sphi 0, %s20
    %s23 = sphi 0, %s21
    %s24 = sphi 0, %s22
    %s36 = sphi 0, %s38
    %s39 = sphi 0, %s36
    %s40 = sphi 0, %s39
    %s56 = sphi 0, %s40
    %s62 = sphi 0, %s64
    %s65 = sphi 0, %s62
    %s66 = sphi 0, %s65
    %s82 = sphi 0, %s66
    %s86 = sphi 0, %s86
    %s88 = sphi 0, %s86
    %s89 = sphi 0, %s88
    %s103 = sphi 0, %s89
    %s109 = sphi 0, %s111
    %s112 = sphi 0, %s109
    %s113 = sphi 0, %s112
    %s129 = sphi 0, %s113
    %s135 = sphi 0, %s137
    %s138 = sphi 0, %s135
    %s139 = sphi 0, %s138
    %s155 = sphi 0, %s139
    %s161 = sphi 0, %s163
    %s164 = sphi 0, %s161
    %s165 = sphi 0, %s164
    %s181 = sphi 0, %s165
  $region4: #{cnn_block_forward.2} parent=0 // loop_header_branch
    %15 = sbr.rel (%p13) target = $region8
  $region5: #{cnn_block_forward.2} parent=0 // loop_body
    %s17 = ssub.s32 %s12, 1
    %s18 = ssub.s32 %s12, 2
    %s25 = sadd.s32 1, %s20
    %p26 = scmp.ge.s32.totalorder %s25, 1
    %s27 = scalar_select %p26, 0, %s25
    %s28 = sadd.s32 1, %s19
    %s29 = scalar_select %p26, %s28, %s19
    %p30 = scmp.ge.s32.totalorder %s29, 2
    %s31 = scalar_select %p30, 0, %s29
    %s32 = ssub.s32 %s19, %s31
    %s33 = ssub.s32 %s20, %s27
    %s34 = sor.u32 %s32, %s33
    %p35 = scmp.eq.s32.totalorder %s34, 0
    %s37 = sadd.s32 %s36, 1
    %s38 = scalar_select %p35, %s36, %s37
    %p41 = pneg %p35
    %p42 = scmp.eq.s32.totalorder %s12, 1
    %p43 = por %p41, %p42
    %p44 = scmp.ne.s32.totalorder %s36, %s39
    %p45 = scmp.eq.s32.totalorder %s12, 0
    %p46 = por %p44, %p45
    %p47 = scmp.ne.s32.totalorder %s36, %s39
    %p48 = scmp.eq.s32.totalorder %s17, 1
    %p49 = por %p47, %p48
    %p50 = scmp.ne.s32.totalorder %s39, %s40
    %p51 = scmp.eq.s32.totalorder %s17, 0
    %p52 = por %p50, %p51
    %p53 = scmp.ne.s32.totalorder %s39, %s40
    %p54 = scmp.eq.s32.totalorder %s18, 1
    %p55 = por %p53, %p54
    %p57 = scmp.ne.s32.totalorder %s40, %s56
    %p58 = scmp.eq.s32.totalorder %s18, 0
    %p59 = por %p57, %p58
    %s60 = ssub.s32 %s20, %s27
    %p61 = scmp.eq.s32.totalorder %s60, 0
    %s63 = sadd.s32 %s62, 1
    %s64 = scalar_select %p61, %s62, %s63
    %p67 = pneg %p61
    %p68 = scmp.eq.s32.totalorder %s12, 1
    %p69 = por %p67, %p68
    %p70 = scmp.ne.s32.totalorder %s62, %s65
    %p71 = scmp.eq.s32.totalorder %s12, 0
    %p72 = por %p70, %p71
    %p73 = scmp.ne.s32.totalorder %s62, %s65
    %p74 = scmp.eq.s32.totalorder %s17, 1
    %p75 = por %p73, %p74
    %p76 = scmp.ne.s32.totalorder %s65, %s66
    %p77 = scmp.eq.s32.totalorder %s17, 0
    %p78 = por %p76, %p77
    %p79 = scmp.ne.s32.totalorder %s65, %s66
    %p80 = scmp.eq.s32.totalorder %s18, 1
    %p81 = por %p79, %p80
    %p83 = scmp.ne.s32.totalorder %s66, %s82
    %p84 = scmp.eq.s32.totalorder %s18, 0
    %p85 = por %p83, %p84
    %s87 = sadd.s32 %s86, 1
    %p90 = scmp.eq.s32.totalorder %s12, 1
    %p91 = scmp.ne.s32.totalorder %s86, %s88
    %p92 = scmp.eq.s32.totalorder %s12, 0
    %p93 = por %p91, %p92
    %p94 = scmp.ne.s32.totalorder %s86, %s88
    %p95 = scmp.eq.s32.totalorder %s17, 1
    %p96 = por %p94, %p95
    %p97 = scmp.ne.s32.totalorder %s88, %s89
    %p98 = scmp.eq.s32.totalorder %s17, 0
    %p99 = por %p97, %p98
    %p100 = scmp.ne.s32.totalorder %s88, %s89
    %p101 = scmp.eq.s32.totalorder %s18, 1
    %p102 = por %p100, %p101
    %p104 = scmp.ne.s32.totalorder %s89, %s103
    %p105 = scmp.eq.s32.totalorder %s18, 0
    %p106 = por %p104, %p105
    %s107 = ssub.s32 %s19, %s31
    %p108 = scmp.eq.s32.totalorder %s107, 0
    %s110 = sadd.s32 %s109, 1
    %s111 = scalar_select %p108, %s109, %s110
    %p114 = pneg %p108
    %p115 = scmp.eq.s32.totalorder %s12, 1
    %p116 = por %p114, %p115
    %p117 = scmp.ne.s32.totalorder %s109, %s112
    %p118 = scmp.eq.s32.totalorder %s12, 0
    %p119 = por %p117, %p118
    %p120 = scmp.ne.s32.totalorder %s109, %s112
    %p121 = scmp.eq.s32.totalorder %s17, 1
    %p122 = por %p120, %p121
    %p123 = scmp.ne.s32.totalorder %s112, %s113
    %p124 = scmp.eq.s32.totalorder %s17, 0
    %p125 = por %p123, %p124
    %p126 = scmp.ne.s32.totalorder %s112, %s113
    %p127 = scmp.eq.s32.totalorder %s18, 1
    %p128 = por %p126, %p127
    %p130 = scmp.ne.s32.totalorder %s113, %s129
    %p131 = scmp.eq.s32.totalorder %s18, 0
    %p132 = por %p130, %p131
    %s133 = ssub.s32 %s19, %s31
    %p134 = scmp.eq.s32.totalorder %s133, 0
    %s136 = sadd.s32 %s135, 1
    %s137 = scalar_select %p134, %s135, %s136
    %p140 = pneg %p134
    %p141 = scmp.eq.s32.totalorder %s12, 1
    %p142 = por %p140, %p141
    %p143 = scmp.ne.s32.totalorder %s135, %s138
    %p144 = scmp.eq.s32.totalorder %s12, 0
    %p145 = por %p143, %p144
    %p146 = scmp.ne.s32.totalorder %s135, %s138
    %p147 = scmp.eq.s32.totalorder %s17, 1
    %p148 = por %p146, %p147
    %p149 = scmp.ne.s32.totalorder %s138, %s139
    %p150 = scmp.eq.s32.totalorder %s17, 0
    %p151 = por %p149, %p150
    %p152 = scmp.ne.s32.totalorder %s138, %s139
    %p153 = scmp.eq.s32.totalorder %s18, 1
    %p154 = por %p152, %p153
    %p156 = scmp.ne.s32.totalorder %s139, %s155
    %p157 = scmp.eq.s32.totalorder %s18, 0
    %p158 = por %p156, %p157
    %s159 = ssub.s32 %s19, %s31
    %p160 = scmp.eq.s32.totalorder %s159, 0
    %s162 = sadd.s32 %s161, 1
    %s163 = scalar_select %p160, %s161, %s162
    %p166 = pneg %p160
    %p167 = scmp.eq.s32.totalorder %s12, 1
    %p168 = por %p166, %p167
    %p169 = scmp.ne.s32.totalorder %s161, %s164
    %p170 = scmp.eq.s32.totalorder %s12, 0
    %p171 = por %p169, %p170
    %p172 = scmp.ne.s32.totalorder %s161, %s164
    %p173 = scmp.eq.s32.totalorder %s17, 1
    %p174 = por %p172, %p173
    %p175 = scmp.ne.s32.totalorder %s164, %s165
    %p176 = scmp.eq.s32.totalorder %s17, 0
    %p177 = por %p175, %p176
    %p178 = scmp.ne.s32.totalorder %s164, %s165
    %p179 = scmp.eq.s32.totalorder %s18, 1
    %p180 = por %p178, %p179
    %p182 = scmp.ne.s32.totalorder %s165, %s181
    %p183 = scmp.eq.s32.totalorder %s18, 0
    %p184 = por %p182, %p183
    %p185 = scmp.le.s32.totalorder 1, %s12
    %p186 = scmp.lt.s32.totalorder %s12, 3
    %p187 = pnand %p185, %p186
    %p188 = pneg %p187
    // Predicated region
    $region9: #{cnn_block_forward.2} parent=5 // pred_check
      _
    $region10: #{cnn_block_forward.2} parent=5 // pred_check_branch
      %190 = sbr.rel (%p187) target = $region12
    $region11: #{cnn_block_forward.2} parent=5 // pred_region
      %s191 = ssub.s32 %s12, 1
      // Predicated region
      $region13: #{cnn_block_forward.2} parent=11 // pred_check
        %p192 = pneg %p78
      $region14: #{cnn_block_forward.2} parent=11 // pred_check_branch
        %194 = sbr.rel (%p192) target = $region16
      $region15: #{cnn_block_forward.2} parent=11 // pred_region
        %s195 = smul.u32 16, %s22
        %p196 = scmp.lt.s32.totalorder %s195, 15
        %s197 = scalar_select %p196, %s195, 15
        %s198 = smul.addr %s197, 4
        %s199 = scalar_lea.vmem %s1, %s198
        %s200 = smul.u32 16, %s22
      $region16: #{cnn_block_forward.2} parent=11 // pred_fallthru
        _
      // Predicated region
      $region17: #{cnn_block_forward.2} parent=11 // pred_check
        %p201 = pneg %p99
      $region18: #{cnn_block_forward.2} parent=11 // pred_check_branch
        %203 = sbr.rel (%p201) target = $region20
      $region19: #{cnn_block_forward.2} parent=11 // pred_region
        _
      $region20: #{cnn_block_forward.2} parent=11 // pred_fallthru
        _
    $region12: #{cnn_block_forward.2} parent=5 // pred_fallthru
      _
    %p204 = scmp.lt.s32.totalorder %s12, 2
    // Predicated region
    $region21: #{cnn_block_forward.2} parent=5 // pred_check
      %p205 = pneg %p204
    $region22: #{cnn_block_forward.2} parent=5 // pred_check_branch
      %207 = sbr.rel (%p205) target = $region24
    $region23: #{cnn_block_forward.2} parent=5 // pred_region
      // Predicated region
      $region25: #{cnn_block_forward.2} parent=23 // pred_check
        %p208 = pneg %p46
      $region26: #{cnn_block_forward.2} parent=23 // pred_check_branch
        %210 = sbr.rel (%p208) target = $region28
      $region27: #{cnn_block_forward.2} parent=23 // pred_region
        %s211 = smul.u32 32, %s19
        %p212 = scmp.lt.s32.totalorder %s211, 63
        %s213 = scalar_select %p212, %s211, 63
        %p214 = scmp.lt.s32.totalorder %s20, 0
        %s215 = scalar_select %p214, %s20, 0
        %s216 = sadd.s32 %s215, %s213
        %s217 = smul.addr %s216, 4
        %s218 = scalar_lea.vmem %s0, %s217
        %s219 = smul.u32 32, %s19
      $region28: #{cnn_block_forward.2} parent=23 // pred_fallthru
        _
    $region24: #{cnn_block_forward.2} parent=5 // pred_fallthru
      _
    %p220 = scmp.le.s32.totalorder 1, %s12
    %p221 = scmp.lt.s32.totalorder %s12, 3
    %p222 = pnand %p220, %p221
    %p223 = pneg %p222
    // Predicated region
    $region29: #{cnn_block_forward.2} parent=5 // pred_check
      _
    $region30: #{cnn_block_forward.2} parent=5 // pred_check_branch
      %225 = sbr.rel (%p222) target = $region32
    $region31: #{cnn_block_forward.2} parent=5 // pred_region
      %s226 = ssub.s32 %s12, 1
      %s227 = smul.u32 32, %s21
      %p228 = scmp.lt.s32.totalorder %s227, 63
      %s229 = scalar_select %p228, %s227, 63
      %p230 = scmp.lt.s32.totalorder %s22, 0
      %s231 = scalar_select %p230, %s22, 0
      %s232 = sadd.s32 %s231, %s229
      %s233 = smul.addr %s232, 4
      %s234 = scalar_lea.vmem %s0, %s233
      %p235 = pneg %p52
      %p236 = pneg %p49
      %s237 = smul.u32 16, %s22
      %p238 = scmp.lt.s32.totalorder %s237, 15
      %s239 = scalar_select %p238, %s237, 15
      %s240 = smul.addr %s239, 4
      %s241 = scalar_lea.vmem %s1, %s240
      %p242 = pneg %p78
      %p243 = pneg %p75
      %p244 = pneg %p99
      %p245 = pneg %p96
      %p246 = pneg %p125
      %p247 = pneg %p122
      %s248 = smul.u32 32, %s21
      %p249 = scmp.lt.s32.totalorder %s248, 63
      %s250 = scalar_select %p249, %s248, 63
      %s251 = smul.addr %s250, 8
      %s252 = scalar_lea.vmem %s3, %s251
      %p253 = pneg %p151
      %p254 = pneg %p148
      %p255 = scmp.lt.s32.totalorder %s21, 1
      %s256 = scalar_select %p255, %s21, 1
      %s257 = smul.addr %s256, 8
      %s258 = scalar_lea.vmem %s4, %s257
      %p259 = pneg %p177
      %p260 = pneg %p174
      %p261 = scmp.lt.s32.totalorder %s21, 1
      %s262 = scalar_select %p261, %s21, 1
      %s263 = smul.addr %s262, 8
      %s264 = scalar_lea.vmem %s5, %s263
      %s265 = smul.u32 32, %s21
      %p266 = scmp.lt.s32.totalorder %s265, 63
      %s267 = scalar_select %p266, %s265, 63
      %p268 = scmp.lt.s32.totalorder %s22, 0
      %s269 = scalar_select %p268, %s22, 0
      %s270 = sadd.s32 %s269, %s267
      %s271 = smul.addr %s270, 4
      %s272 = scalar_lea.vmem %s0, %s271
      %s273 = smul.u32 32, %s21
      %s274 = smul.u32 16, %s22
      %p275 = scmp.lt.s32.totalorder %s274, 15
      %s276 = scalar_select %p275, %s274, 15
      %s277 = smul.addr %s276, 4
      %s278 = scalar_lea.vmem %s1, %s277
      %s279 = smul.u32 16, %s22
      %s280 = smul.u32 32, %s21
      %p281 = scmp.lt.s32.totalorder %s280, 63
      %s282 = scalar_select %p281, %s280, 63
      %s283 = smul.addr %s282, 8
      %s284 = scalar_lea.vmem %s3, %s283
      %s285 = smul.u32 32, %s21
      %p286 = scmp.lt.s32.totalorder %s21, 1
      %s287 = scalar_select %p286, %s21, 1
      %s288 = smul.addr %s287, 8
      %s289 = scalar_lea.vmem %s4, %s288
      %p290 = scmp.lt.s32.totalorder %s21, 1
      %s291 = scalar_select %p290, %s21, 1
      %s292 = smul.addr %s291, 8
      %s293 = scalar_lea.vmem %s5, %s292
      %p294 = scmp.eq.s32.totalorder %s22, 0
      // Predicated region
      $region33: #{cnn_block_forward.2} parent=31 // pred_check
        %p295 = pneg %p294
      $region34: #{cnn_block_forward.2} parent=31 // pred_check_branch
        %297 = sbr.rel (%p295) target = $region36
      $region35: #{cnn_block_forward.2} parent=31 // pred_region
        %298 = vst [vmem:[#allocation2] sm:$0xff] 0.0
        %299 = vst [vmem:[#allocation2 + $0x8] sm:$0xff] 0.0
        %300 = vst [vmem:[#allocation2 + $0x10] sm:$0xff] 0.0
        %301 = vst [vmem:[#allocation2 + $0x18] sm:$0xff] 0.0
        %302 = vst [vmem:[#allocation2 + $0x20] sm:$0xff] 0.0
        %303 = vst [vmem:[#allocation2 + $0x28] sm:$0xff] 0.0
        %304 = vst [vmem:[#allocation2 + $0x30] sm:$0xff] 0.0
        %305 = vst [vmem:[#allocation2 + $0x38] sm:$0xff] 0.0
        %306 = vst [vmem:[#allocation2 + $0x40] sm:$0xff] 0.0
        %307 = vst [vmem:[#allocation2 + $0x48] sm:$0xff] 0.0
        %308 = vst [vmem:[#allocation2 + $0x50] sm:$0xff] 0.0
        %309 = vst [vmem:[#allocation2 + $0x58] sm:$0xff] 0.0
        %310 = vst [vmem:[#allocation2 + $0x60] sm:$0xff] 0.0
        %311 = vst [vmem:[#allocation2 + $0x68] sm:$0xff] 0.0
        %312 = vst [vmem:[#allocation2 + $0x70] sm:$0xff] 0.0
        %313 = vst [vmem:[#allocation2 + $0x78] sm:$0xff] 0.0
        %314 = vst [vmem:[#allocation2 + $0x80] sm:$0xff] 0.0
        %315 = vst [vmem:[#allocation2 + $0x88] sm:$0xff] 0.0
        %316 = vst [vmem:[#allocation2 + $0x90] sm:$0xff] 0.0
        %317 = vst [vmem:[#allocation2 + $0x98] sm:$0xff] 0.0
        %318 = vst [vmem:[#allocation2 + $0xa0] sm:$0xff] 0.0
        %319 = vst [vmem:[#allocation2 + $0xa8] sm:$0xff] 0.0
        %320 = vst [vmem:[#allocation2 + $0xb0] sm:$0xff] 0.0
        %321 = vst [vmem:[#allocation2 + $0xb8] sm:$0xff] 0.0
        %322 = vst [vmem:[#allocation2 + $0xc0] sm:$0xff] 0.0
        %323 = vst [vmem:[#allocation2 + $0xc8] sm:$0xff] 0.0
        %324 = vst [vmem:[#allocation2 + $0xd0] sm:$0xff] 0.0
        %325 = vst [vmem:[#allocation2 + $0xd8] sm:$0xff] 0.0
        %326 = vst [vmem:[#allocation2 + $0xe0] sm:$0xff] 0.0
        %327 = vst [vmem:[#allocation2 + $0xe8] sm:$0xff] 0.0
        %328 = vst [vmem:[#allocation2 + $0xf0] sm:$0xff] 0.0
        %329 = vst [vmem:[#allocation2 + $0xf8] sm:$0xff] 0.0
      $region36: #{cnn_block_forward.2} parent=31 // pred_fallthru
        _
      %v330 = vld [vmem:[#allocation2] sm:$0xff]
      %v331 = vld [vmem:[#allocation2 + $0x8] sm:$0xff]
      %v332 = vld [vmem:[#allocation2 + $0x10] sm:$0xff]
      %v333 = vld [vmem:[#allocation2 + $0x18] sm:$0xff]
      %v334 = vld [vmem:[#allocation2 + $0x20] sm:$0xff]
      %v335 = vld [vmem:[#allocation2 + $0x28] sm:$0xff]
      %v336 = vld [vmem:[#allocation2 + $0x30] sm:$0xff]
      %v337 = vld [vmem:[#allocation2 + $0x38] sm:$0xff]
      %v338 = vld [vmem:[#allocation2 + $0x40] sm:$0xff]
      %v339 = vld [vmem:[#allocation2 + $0x48] sm:$0xff]
      %v340 = vld [vmem:[#allocation2 + $0x50] sm:$0xff]
      %v341 = vld [vmem:[#allocation2 + $0x58] sm:$0xff]
      %v342 = vld [vmem:[#allocation2 + $0x60] sm:$0xff]
      %v343 = vld [vmem:[#allocation2 + $0x68] sm:$0xff]
      %v344 = vld [vmem:[#allocation2 + $0x70] sm:$0xff]
      %v345 = vld [vmem:[#allocation2 + $0x78] sm:$0xff]
      %v346 = vld [vmem:[#allocation2 + $0x80] sm:$0xff]
      %v347 = vld [vmem:[#allocation2 + $0x88] sm:$0xff]
      %v348 = vld [vmem:[#allocation2 + $0x90] sm:$0xff]
      %v349 = vld [vmem:[#allocation2 + $0x98] sm:$0xff]
      %v350 = vld [vmem:[#allocation2 + $0xa0] sm:$0xff]
      %v351 = vld [vmem:[#allocation2 + $0xa8] sm:$0xff]
      %v352 = vld [vmem:[#allocation2 + $0xb0] sm:$0xff]
      %v353 = vld [vmem:[#allocation2 + $0xb8] sm:$0xff]
      %v354 = vld [vmem:[#allocation2 + $0xc0] sm:$0xff]
      %v355 = vld [vmem:[#allocation2 + $0xc8] sm:$0xff]
      %v356 = vld [vmem:[#allocation2 + $0xd0] sm:$0xff]
      %v357 = vld [vmem:[#allocation2 + $0xd8] sm:$0xff]
      %v358 = vld [vmem:[#allocation2 + $0xe0] sm:$0xff]
      %v359 = vld [vmem:[#allocation2 + $0xe8] sm:$0xff]
      %v360 = vld [vmem:[#allocation2 + $0xf0] sm:$0xff]
      %v361 = vld [vmem:[#allocation2 + $0xf8] sm:$0xff]
      %v362 = vld [vmem:[%s272] sm:$0xf]
      %v363 = vld [vmem:[%s272 + $0x4] sm:$0xf]
      %v364 = vld [vmem:[%s272 + $0x8] sm:$0xf]
      %v365 = vld [vmem:[%s272 + $0xc] sm:$0xf]
      %v366 = vld [vmem:[%s272 + $0x10] sm:$0xf]
      %v367 = vld [vmem:[%s272 + $0x14] sm:$0xf]
      %v368 = vld [vmem:[%s272 + $0x18] sm:$0xf]
      %v369 = vld [vmem:[%s272 + $0x1c] sm:$0xf]
      %v370 = vld [vmem:[%s272 + $0x20] sm:$0xf]
      %v371 = vld [vmem:[%s272 + $0x24] sm:$0xf]
      %v372 = vld [vmem:[%s272 + $0x28] sm:$0xf]
      %v373 = vld [vmem:[%s272 + $0x2c] sm:$0xf]
      %v374 = vld [vmem:[%s272 + $0x30] sm:$0xf]
      %v375 = vld [vmem:[%s272 + $0x34] sm:$0xf]
      %v376 = vld [vmem:[%s272 + $0x38] sm:$0xf]
      %v377 = vld [vmem:[%s272 + $0x3c] sm:$0xf]
      %v378 = vld [vmem:[%s272 + $0x40] sm:$0xf]
      %v379 = vld [vmem:[%s272 + $0x44] sm:$0xf]
      %v380 = vld [vmem:[%s272 + $0x48] sm:$0xf]
      %v381 = vld [vmem:[%s272 + $0x4c] sm:$0xf]
      %v382 = vld [vmem:[%s272 + $0x50] sm:$0xf]
      %v383 = vld [vmem:[%s272 + $0x54] sm:$0xf]
      %v384 = vld [vmem:[%s272 + $0x58] sm:$0xf]
      %v385 = vld [vmem:[%s272 + $0x5c] sm:$0xf]
      %v386 = vld [vmem:[%s272 + $0x60] sm:$0xf]
      %v387 = vld [vmem:[%s272 + $0x64] sm:$0xf]
      %v388 = vld [vmem:[%s272 + $0x68] sm:$0xf]
      %v389 = vld [vmem:[%s272 + $0x6c] sm:$0xf]
      %v390 = vld [vmem:[%s272 + $0x70] sm:$0xf]
      %v391 = vld [vmem:[%s272 + $0x74] sm:$0xf]
      %v392 = vld [vmem:[%s272 + $0x78] sm:$0xf]
      %v393 = vld [vmem:[%s272 + $0x7c] sm:$0xf]
      %v394 = vld [vmem:[%s278] sm:$0xf]
      %v395 = vld [vmem:[%s278 + $0x4] sm:$0xf]
      %v396 = vld [vmem:[%s278 + $0x8] sm:$0xf]
      %v397 = vld [vmem:[%s278 + $0xc] sm:$0xf]
      %v398 = vld [vmem:[%s278 + $0x10] sm:$0xf]
      %v399 = vld [vmem:[%s278 + $0x14] sm:$0xf]
      %v400 = vld [vmem:[%s278 + $0x18] sm:$0xf]
      %v401 = vld [vmem:[%s278 + $0x1c] sm:$0xf]
      %v402 = vld [vmem:[%s278 + $0x20] sm:$0xf]
      %v403 = vld [vmem:[%s278 + $0x24] sm:$0xf]
      %v404 = vld [vmem:[%s278 + $0x28] sm:$0xf]
      %v405 = vld [vmem:[%s278 + $0x2c] sm:$0xf]
      %v406 = vld [vmem:[%s278 + $0x30] sm:$0xf]
      %v407 = vld [vmem:[%s278 + $0x34] sm:$0xf]
      %v408 = vld [vmem:[%s278 + $0x38] sm:$0xf]
      %v409 = vld [vmem:[%s278 + $0x3c] sm:$0xf]
      %v442 = vunpack.c.l.b16 %v362
      %v443 = vunpack.c.l.b16 %v363
      %v444 = vunpack.c.l.b16 %v364
      %v445 = vunpack.c.l.b16 %v365
      %v446 = vunpack.c.l.b16 %v366
      %v447 = vunpack.c.l.b16 %v367
      %v448 = vunpack.c.l.b16 %v368
      %v449 = vunpack.c.l.b16 %v369
      %v450 = vunpack.c.l.b16 %v370
      %v451 = vunpack.c.l.b16 %v371
      %v452 = vunpack.c.l.b16 %v372
      %v453 = vunpack.c.l.b16 %v373
      %v454 = vunpack.c.l.b16 %v374
      %v455 = vunpack.c.l.b16 %v375
      %v456 = vunpack.c.l.b16 %v376
      %v457 = vunpack.c.l.b16 %v377
      %v458 = vunpack.c.l.b16 %v378
      %v459 = vunpack.c.l.b16 %v379
      %v460 = vunpack.c.l.b16 %v380
      %v461 = vunpack.c.l.b16 %v381
      %v462 = vunpack.c.l.b16 %v382
      %v463 = vunpack.c.l.b16 %v383
      %v464 = vunpack.c.l.b16 %v384
      %v465 = vunpack.c.l.b16 %v385
      %v466 = vunpack.c.l.b16 %v386
      %v467 = vunpack.c.l.b16 %v387
      %v468 = vunpack.c.l.b16 %v388
      %v469 = vunpack.c.l.b16 %v389
      %v470 = vunpack.c.l.b16 %v390
      %v471 = vunpack.c.l.b16 %v391
      %v472 = vunpack.c.l.b16 %v392
      %v473 = vunpack.c.l.b16 %v393
      %v474 = vpack.c.b16 %v443, %v442
      %v475 = vpack.c.b16 %v445, %v444
      %v476 = vpack.c.b16 %v447, %v446
      %v477 = vpack.c.b16 %v449, %v448
      %v478 = vpack.c.b16 %v451, %v450
      %v479 = vpack.c.b16 %v453, %v452
      %v480 = vpack.c.b16 %v455, %v454
      %v481 = vpack.c.b16 %v457, %v456
      %v482 = vpack.c.b16 %v459, %v458
      %v483 = vpack.c.b16 %v461, %v460
      %v484 = vpack.c.b16 %v463, %v462
      %v485 = vpack.c.b16 %v465, %v464
      %v486 = vpack.c.b16 %v467, %v466
      %v487 = vpack.c.b16 %v469, %v468
      %v488 = vpack.c.b16 %v471, %v470
      %v489 = vpack.c.b16 %v473, %v472
      %v522 = vunpack.c.l.b16 %v394
      %v523 = vunpack.c.l.b16 %v395
      %v524 = vunpack.c.l.b16 %v396
      %v525 = vunpack.c.l.b16 %v397
      %v526 = vunpack.c.l.b16 %v398
      %v527 = vunpack.c.l.b16 %v399
      %v528 = vunpack.c.l.b16 %v400
      %v529 = vunpack.c.l.b16 %v401
      %v530 = vunpack.c.l.b16 %v402
      %v531 = vunpack.c.l.b16 %v403
      %v532 = vunpack.c.l.b16 %v404
      %v533 = vunpack.c.l.b16 %v405
      %v534 = vunpack.c.l.b16 %v406
      %v535 = vunpack.c.l.b16 %v407
      %v536 = vunpack.c.l.b16 %v408
      %v537 = vunpack.c.l.b16 %v409
      %v538 = vpack.c.b16 %v523, %v522
      %v539 = vpack.c.b16 %v525, %v524
      %v540 = vpack.c.b16 %v527, %v526
      %v541 = vpack.c.b16 %v529, %v528
      %v542 = vpack.c.b16 %v531, %v530
      %v543 = vpack.c.b16 %v533, %v532
      %v544 = vpack.c.b16 %v535, %v534
      %v545 = vpack.c.b16 %v537, %v536
      %554 = vmatpush.bf16.msra.mxu0 %v545
      %555 = vmatpush.bf16.msra.mxu0 %v544
      %556 = vmatpush.bf16.msra.mxu0 %v543
      %557 = vmatpush.bf16.msra.mxu0 %v542
      %558 = vmatpush.bf16.msra.mxu0 %v541
      %559 = vmatpush.bf16.msra.mxu0 %v540
      %560 = vmatpush.bf16.msra.mxu0 %v539
      %561 = vmatpush.bf16.msra.mxu0 %v538
      %562 = vmatmul.bf16.gmra.mxu0 %v474
      %v563 = vpop.f32.mrf.mxu0
      %v564 = vadd.f32 0.0, %v563
      %v565 = vpop.f32.mrf.mxu0
      %v566 = vadd.f32 0.0, %v565
      %567 = vmatmul.bf16.gmra.mxu0 %v475
      %v568 = vpop.f32.mrf.mxu0
      %v569 = vadd.f32 0.0, %v568
      %v570 = vpop.f32.mrf.mxu0
      %v571 = vadd.f32 0.0, %v570
      %572 = vmatmul.bf16.gmra.mxu0 %v476
      %v573 = vpop.f32.mrf.mxu0
      %v574 = vadd.f32 0.0, %v573
      %v575 = vpop.f32.mrf.mxu0
      %v576 = vadd.f32 0.0, %v575
      %577 = vmatmul.bf16.gmra.mxu0 %v477
      %v578 = vpop.f32.mrf.mxu0
      %v579 = vadd.f32 0.0, %v578
      %v580 = vpop.f32.mrf.mxu0
      %v581 = vadd.f32 0.0, %v580
      %582 = vmatmul.bf16.gmra.mxu0 %v478
      %v583 = vpop.f32.mrf.mxu0
      %v584 = vadd.f32 0.0, %v583
      %v585 = vpop.f32.mrf.mxu0
      %v586 = vadd.f32 0.0, %v585
      %587 = vmatmul.bf16.gmra.mxu0 %v479
      %v588 = vpop.f32.mrf.mxu0
      %v589 = vadd.f32 0.0, %v588
      %v590 = vpop.f32.mrf.mxu0
      %v591 = vadd.f32 0.0, %v590
      %592 = vmatmul.bf16.gmra.mxu0 %v480
      %v593 = vpop.f32.mrf.mxu0
      %v594 = vadd.f32 0.0, %v593
      %v595 = vpop.f32.mrf.mxu0
      %v596 = vadd.f32 0.0, %v595
      %597 = vmatmul.bf16.gmra.mxu0 %v481
      %v598 = vpop.f32.mrf.mxu0
      %v599 = vadd.f32 0.0, %v598
      %v600 = vpop.f32.mrf.mxu0
      %v601 = vadd.f32 0.0, %v600
      %602 = vmatmul.bf16.gmra.mxu0 %v482
      %v603 = vpop.f32.mrf.mxu0
      %v604 = vadd.f32 0.0, %v603
      %v605 = vpop.f32.mrf.mxu0
      %v606 = vadd.f32 0.0, %v605
      %607 = vmatmul.bf16.gmra.mxu0 %v483
      %v608 = vpop.f32.mrf.mxu0
      %v609 = vadd.f32 0.0, %v608
      %v610 = vpop.f32.mrf.mxu0
      %v611 = vadd.f32 0.0, %v610
      %612 = vmatmul.bf16.gmra.mxu0 %v484
      %v613 = vpop.f32.mrf.mxu0
      %v614 = vadd.f32 0.0, %v613
      %v615 = vpop.f32.mrf.mxu0
      %v616 = vadd.f32 0.0, %v615
      %617 = vmatmul.bf16.gmra.mxu0 %v485
      %v618 = vpop.f32.mrf.mxu0
      %v619 = vadd.f32 0.0, %v618
      %v620 = vpop.f32.mrf.mxu0
      %v621 = vadd.f32 0.0, %v620
      %622 = vmatmul.bf16.gmra.mxu0 %v486
      %v623 = vpop.f32.mrf.mxu0
      %v624 = vadd.f32 0.0, %v623
      %v625 = vpop.f32.mrf.mxu0
      %v626 = vadd.f32 0.0, %v625
      %627 = vmatmul.bf16.gmra.mxu0 %v487
      %v628 = vpop.f32.mrf.mxu0
      %v629 = vadd.f32 0.0, %v628
      %v630 = vpop.f32.mrf.mxu0
      %v631 = vadd.f32 0.0, %v630
      %632 = vmatmul.bf16.gmra.mxu0 %v488
      %v633 = vpop.f32.mrf.mxu0
      %v634 = vadd.f32 0.0, %v633
      %v635 = vpop.f32.mrf.mxu0
      %v636 = vadd.f32 0.0, %v635
      %637 = vmatmul.bf16.gmra.mxu0 %v489
      %v638 = vpop.f32.mrf.mxu0
      %v639 = vadd.f32 0.0, %v638
      %v640 = vpop.f32.mrf.mxu0
      %v641 = vadd.f32 0.0, %v640
      %642 = vdwg.mxu0
      %v643 = vadd.f32 %v330, %v564
      %v644 = vadd.f32 %v331, %v566
      %v645 = vadd.f32 %v332, %v569
      %v646 = vadd.f32 %v333, %v571
      %v647 = vadd.f32 %v334, %v574
      %v648 = vadd.f32 %v335, %v576
      %v649 = vadd.f32 %v336, %v579
      %v650 = vadd.f32 %v337, %v581
      %v651 = vadd.f32 %v338, %v584
      %v652 = vadd.f32 %v339, %v586
      %v653 = vadd.f32 %v340, %v589
      %v654 = vadd.f32 %v341, %v591
      %v655 = vadd.f32 %v342, %v594
      %v656 = vadd.f32 %v343, %v596
      %v657 = vadd.f32 %v344, %v599
      %v658 = vadd.f32 %v345, %v601
      %v659 = vadd.f32 %v346, %v604
      %v660 = vadd.f32 %v347, %v606
      %v661 = vadd.f32 %v348, %v609
      %v662 = vadd.f32 %v349, %v611
      %v663 = vadd.f32 %v350, %v614
      %v664 = vadd.f32 %v351, %v616
      %v665 = vadd.f32 %v352, %v619
      %v666 = vadd.f32 %v353, %v621
      %v667 = vadd.f32 %v354, %v624
      %v668 = vadd.f32 %v355, %v626
      %v669 = vadd.f32 %v356, %v629
      %v670 = vadd.f32 %v357, %v631
      %v671 = vadd.f32 %v358, %v634
      %v672 = vadd.f32 %v359, %v636
      %v673 = vadd.f32 %v360, %v639
      %v674 = vadd.f32 %v361, %v641
      %675 = vst [vmem:[#allocation2] sm:$0xff] %v643
      %676 = vst [vmem:[#allocation2 + $0x8] sm:$0xff] %v644
      %677 = vst [vmem:[#allocation2 + $0x10] sm:$0xff] %v645
      %678 = vst [vmem:[#allocation2 + $0x18] sm:$0xff] %v646
      %679 = vst [vmem:[#allocation2 + $0x20] sm:$0xff] %v647
      %680 = vst [vmem:[#allocation2 + $0x28] sm:$0xff] %v648
      %681 = vst [vmem:[#allocation2 + $0x30] sm:$0xff] %v649
      %682 = vst [vmem:[#allocation2 + $0x38] sm:$0xff] %v650
      %683 = vst [vmem:[#allocation2 + $0x40] sm:$0xff] %v651
      %684 = vst [vmem:[#allocation2 + $0x48] sm:$0xff] %v652
      %685 = vst [vmem:[#allocation2 + $0x50] sm:$0xff] %v653
      %686 = vst [vmem:[#allocation2 + $0x58] sm:$0xff] %v654
      %687 = vst [vmem:[#allocation2 + $0x60] sm:$0xff] %v655
      %688 = vst [vmem:[#allocation2 + $0x68] sm:$0xff] %v656
      %689 = vst [vmem:[#allocation2 + $0x70] sm:$0xff] %v657
      %690 = vst [vmem:[#allocation2 + $0x78] sm:$0xff] %v658
      %691 = vst [vmem:[#allocation2 + $0x80] sm:$0xff] %v659
      %692 = vst [vmem:[#allocation2 + $0x88] sm:$0xff] %v660
      %693 = vst [vmem:[#allocation2 + $0x90] sm:$0xff] %v661
      %694 = vst [vmem:[#allocation2 + $0x98] sm:$0xff] %v662
      %695 = vst [vmem:[#allocation2 + $0xa0] sm:$0xff] %v663
      %696 = vst [vmem:[#allocation2 + $0xa8] sm:$0xff] %v664
      %697 = vst [vmem:[#allocation2 + $0xb0] sm:$0xff] %v665
      %698 = vst [vmem:[#allocation2 + $0xb8] sm:$0xff] %v666
      %699 = vst [vmem:[#allocation2 + $0xc0] sm:$0xff] %v667
      %700 = vst [vmem:[#allocation2 + $0xc8] sm:$0xff] %v668
      %701 = vst [vmem:[#allocation2 + $0xd0] sm:$0xff] %v669
      %702 = vst [vmem:[#allocation2 + $0xd8] sm:$0xff] %v670
      %703 = vst [vmem:[#allocation2 + $0xe0] sm:$0xff] %v671
      %704 = vst [vmem:[#allocation2 + $0xe8] sm:$0xff] %v672
      %705 = vst [vmem:[#allocation2 + $0xf0] sm:$0xff] %v673
      %706 = vst [vmem:[#allocation2 + $0xf8] sm:$0xff] %v674
      // Predicated region
      $region37: #{cnn_block_forward.2} parent=31 // pred_check
        %p707 = pneg %p294
      $region38: #{cnn_block_forward.2} parent=31 // pred_check_branch
        %709 = sbr.rel (%p707) target = $region40
      $region39: #{cnn_block_forward.2} parent=31 // pred_region
        %v710 = vld [vmem:[#allocation2] sm:$0xff]
        %v711 = vld [vmem:[#allocation2 + $0x8] sm:$0xff]
        %v712 = vld [vmem:[#allocation2 + $0x10] sm:$0xff]
        %v713 = vld [vmem:[#allocation2 + $0x18] sm:$0xff]
        %v714 = vld [vmem:[#allocation2 + $0x20] sm:$0xff]
        %v715 = vld [vmem:[#allocation2 + $0x28] sm:$0xff]
        %v716 = vld [vmem:[#allocation2 + $0x30] sm:$0xff]
        %v717 = vld [vmem:[#allocation2 + $0x38] sm:$0xff]
        %v718 = vld [vmem:[#allocation2 + $0x40] sm:$0xff]
        %v719 = vld [vmem:[#allocation2 + $0x48] sm:$0xff]
        %v720 = vld [vmem:[#allocation2 + $0x50] sm:$0xff]
        %v721 = vld [vmem:[#allocation2 + $0x58] sm:$0xff]
        %v722 = vld [vmem:[#allocation2 + $0x60] sm:$0xff]
        %v723 = vld [vmem:[#allocation2 + $0x68] sm:$0xff]
        %v724 = vld [vmem:[#allocation2 + $0x70] sm:$0xff]
        %v725 = vld [vmem:[#allocation2 + $0x78] sm:$0xff]
        %v726 = vld [vmem:[#allocation2 + $0x80] sm:$0xff]
        %v727 = vld [vmem:[#allocation2 + $0x88] sm:$0xff]
        %v728 = vld [vmem:[#allocation2 + $0x90] sm:$0xff]
        %v729 = vld [vmem:[#allocation2 + $0x98] sm:$0xff]
        %v730 = vld [vmem:[#allocation2 + $0xa0] sm:$0xff]
        %v731 = vld [vmem:[#allocation2 + $0xa8] sm:$0xff]
        %v732 = vld [vmem:[#allocation2 + $0xb0] sm:$0xff]
        %v733 = vld [vmem:[#allocation2 + $0xb8] sm:$0xff]
        %v734 = vld [vmem:[#allocation2 + $0xc0] sm:$0xff]
        %v735 = vld [vmem:[#allocation2 + $0xc8] sm:$0xff]
        %v736 = vld [vmem:[#allocation2 + $0xd0] sm:$0xff]
        %v737 = vld [vmem:[#allocation2 + $0xd8] sm:$0xff]
        %v738 = vld [vmem:[#allocation2 + $0xe0] sm:$0xff]
        %v739 = vld [vmem:[#allocation2 + $0xe8] sm:$0xff]
        %v740 = vld [vmem:[#allocation2 + $0xf0] sm:$0xff]
        %v741 = vld [vmem:[#allocation2 + $0xf8] sm:$0xff]
        %v742 = vld [vmem:[%s2] sm:$0x1]
        %v744 = vperm.slane %v742, 0
        %v746 = vadd.f32 %v710, %v744
        %v747 = vadd.f32 %v711, %v744
        %v748 = vadd.f32 %v712, %v744
        %v749 = vadd.f32 %v713, %v744
        %v750 = vadd.f32 %v714, %v744
        %v751 = vadd.f32 %v715, %v744
        %v752 = vadd.f32 %v716, %v744
        %v753 = vadd.f32 %v717, %v744
        %v754 = vadd.f32 %v718, %v744
        %v755 = vadd.f32 %v719, %v744
        %v756 = vadd.f32 %v720, %v744
        %v757 = vadd.f32 %v721, %v744
        %v758 = vadd.f32 %v722, %v744
        %v759 = vadd.f32 %v723, %v744
        %v760 = vadd.f32 %v724, %v744
        %v761 = vadd.f32 %v725, %v744
        %v762 = vadd.f32 %v726, %v744
        %v763 = vadd.f32 %v727, %v744
        %v764 = vadd.f32 %v728, %v744
        %v765 = vadd.f32 %v729, %v744
        %v766 = vadd.f32 %v730, %v744
        %v767 = vadd.f32 %v731, %v744
        %v768 = vadd.f32 %v732, %v744
        %v769 = vadd.f32 %v733, %v744
        %v770 = vadd.f32 %v734, %v744
        %v771 = vadd.f32 %v735, %v744
        %v772 = vadd.f32 %v736, %v744
        %v773 = vadd.f32 %v737, %v744
        %v774 = vadd.f32 %v738, %v744
        %v775 = vadd.f32 %v739, %v744
        %v776 = vadd.f32 %v740, %v744
        %v777 = vadd.f32 %v741, %v744
        %778 = vst [vmem:[%s284] sm:$0xff] %v746
        %779 = vst [vmem:[%s284 + $0x8] sm:$0xff] %v747
        %780 = vst [vmem:[%s284 + $0x10] sm:$0xff] %v748
        %781 = vst [vmem:[%s284 + $0x18] sm:$0xff] %v749
        %782 = vst [vmem:[%s284 + $0x20] sm:$0xff] %v750
        %783 = vst [vmem:[%s284 + $0x28] sm:$0xff] %v751
        %784 = vst [vmem:[%s284 + $0x30] sm:$0xff] %v752
        %785 = vst [vmem:[%s284 + $0x38] sm:$0xff] %v753
        %786 = vst [vmem:[%s284 + $0x40] sm:$0xff] %v754
        %787 = vst [vmem:[%s284 + $0x48] sm:$0xff] %v755
        %788 = vst [vmem:[%s284 + $0x50] sm:$0xff] %v756
        %789 = vst [vmem:[%s284 + $0x58] sm:$0xff] %v757
        %790 = vst [vmem:[%s284 + $0x60] sm:$0xff] %v758
        %791 = vst [vmem:[%s284 + $0x68] sm:$0xff] %v759
        %792 = vst [vmem:[%s284 + $0x70] sm:$0xff] %v760
        %793 = vst [vmem:[%s284 + $0x78] sm:$0xff] %v761
        %794 = vst [vmem:[%s284 + $0x80] sm:$0xff] %v762
        %795 = vst [vmem:[%s284 + $0x88] sm:$0xff] %v763
        %796 = vst [vmem:[%s284 + $0x90] sm:$0xff] %v764
        %797 = vst [vmem:[%s284 + $0x98] sm:$0xff] %v765
        %798 = vst [vmem:[%s284 + $0xa0] sm:$0xff] %v766
        %799 = vst [vmem:[%s284 + $0xa8] sm:$0xff] %v767
        %800 = vst [vmem:[%s284 + $0xb0] sm:$0xff] %v768
        %801 = vst [vmem:[%s284 + $0xb8] sm:$0xff] %v769
        %802 = vst [vmem:[%s284 + $0xc0] sm:$0xff] %v770
        %803 = vst [vmem:[%s284 + $0xc8] sm:$0xff] %v771
        %804 = vst [vmem:[%s284 + $0xd0] sm:$0xff] %v772
        %805 = vst [vmem:[%s284 + $0xd8] sm:$0xff] %v773
        %806 = vst [vmem:[%s284 + $0xe0] sm:$0xff] %v774
        %807 = vst [vmem:[%s284 + $0xe8] sm:$0xff] %v775
        %808 = vst [vmem:[%s284 + $0xf0] sm:$0xff] %v776
        %809 = vst [vmem:[%s284 + $0xf8] sm:$0xff] %v777
        %v810 = vadd.f32 %v746, %v747
        %v811 = vadd.f32 %v810, %v748
        %v812 = vadd.f32 %v811, %v749
        %v813 = vadd.f32 %v812, %v750
        %v814 = vadd.f32 %v813, %v751
        %v815 = vadd.f32 %v814, %v752
        %v816 = vadd.f32 %v815, %v753
        %v817 = vadd.f32 %v816, %v754
        %v818 = vadd.f32 %v817, %v755
        %v819 = vadd.f32 %v818, %v756
        %v820 = vadd.f32 %v819, %v757
        %v821 = vadd.f32 %v820, %v758
        %v822 = vadd.f32 %v821, %v759
        %v823 = vadd.f32 %v822, %v760
        %v824 = vadd.f32 %v823, %v761
        %v825 = vadd.f32 %v824, %v762
        %v826 = vadd.f32 %v825, %v763
        %v827 = vadd.f32 %v826, %v764
        %v828 = vadd.f32 %v827, %v765
        %v829 = vadd.f32 %v828, %v766
        %v830 = vadd.f32 %v829, %v767
        %v831 = vadd.f32 %v830, %v768
        %v832 = vadd.f32 %v831, %v769
        %v833 = vadd.f32 %v832, %v770
        %v834 = vadd.f32 %v833, %v771
        %v835 = vadd.f32 %v834, %v772
        %v836 = vadd.f32 %v835, %v773
        %v837 = vadd.f32 %v836, %v774
        %v838 = vadd.f32 %v837, %v775
        %v839 = vadd.f32 %v838, %v776
        %v840 = vadd.f32 %v839, %v777
        %v841 = vrot.slane %v840, 4
        %v842 = vadd.f32 %v840, %v841
        %v843 = vrot.slane %v842, 2
        %v844 = vadd.f32 %v842, %v843
        %v845 = vrot.slane %v844, 1
        %v846 = vadd.f32 %v844, %v845
        %v847 = vmul.f32 %v746, %v746
        %v848 = vmul.f32 %v747, %v747
        %v849 = vmul.f32 %v748, %v748
        %v850 = vmul.f32 %v749, %v749
        %v851 = vmul.f32 %v750, %v750
        %v852 = vmul.f32 %v751, %v751
        %v853 = vmul.f32 %v752, %v752
        %v854 = vmul.f32 %v753, %v753
        %v855 = vmul.f32 %v754, %v754
        %v856 = vmul.f32 %v755, %v755
        %v857 = vmul.f32 %v756, %v756
        %v858 = vmul.f32 %v757, %v757
        %v859 = vmul.f32 %v758, %v758
        %v860 = vmul.f32 %v759, %v759
        %v861 = vmul.f32 %v760, %v760
        %v862 = vmul.f32 %v761, %v761
        %v863 = vmul.f32 %v762, %v762
        %v864 = vmul.f32 %v763, %v763
        %v865 = vmul.f32 %v764, %v764
        %v866 = vmul.f32 %v765, %v765
        %v867 = vmul.f32 %v766, %v766
        %v868 = vmul.f32 %v767, %v767
        %v869 = vmul.f32 %v768, %v768
        %v870 = vmul.f32 %v769, %v769
        %v871 = vmul.f32 %v770, %v770
        %v872 = vmul.f32 %v771, %v771
        %v873 = vmul.f32 %v772, %v772
        %v874 = vmul.f32 %v773, %v773
        %v875 = vmul.f32 %v774, %v774
        %v876 = vmul.f32 %v775, %v775
        %v877 = vmul.f32 %v776, %v776
        %v878 = vmul.f32 %v777, %v777
        %v879 = vadd.f32 %v847, %v848
        %v880 = vadd.f32 %v879, %v849
        %v881 = vadd.f32 %v880, %v850
        %v882 = vadd.f32 %v881, %v851
        %v883 = vadd.f32 %v882, %v852
        %v884 = vadd.f32 %v883, %v853
        %v885 = vadd.f32 %v884, %v854
        %v886 = vadd.f32 %v885, %v855
        %v887 = vadd.f32 %v886, %v856
        %v888 = vadd.f32 %v887, %v857
        %v889 = vadd.f32 %v888, %v858
        %v890 = vadd.f32 %v889, %v859
        %v891 = vadd.f32 %v890, %v860
        %v892 = vadd.f32 %v891, %v861
        %v893 = vadd.f32 %v892, %v862
        %v894 = vadd.f32 %v893, %v863
        %v895 = vadd.f32 %v894, %v864
        %v896 = vadd.f32 %v895, %v865
        %v897 = vadd.f32 %v896, %v866
        %v898 = vadd.f32 %v897, %v867
        %v899 = vadd.f32 %v898, %v868
        %v900 = vadd.f32 %v899, %v869
        %v901 = vadd.f32 %v900, %v870
        %v902 = vadd.f32 %v901, %v871
        %v903 = vadd.f32 %v902, %v872
        %v904 = vadd.f32 %v903, %v873
        %v905 = vadd.f32 %v904, %v874
        %v906 = vadd.f32 %v905, %v875
        %v907 = vadd.f32 %v906, %v876
        %v908 = vadd.f32 %v907, %v877
        %v909 = vadd.f32 %v908, %v878
        %v910 = vrot.slane %v909, 4
        %v911 = vadd.f32 %v909, %v910
        %v912 = vrot.slane %v911, 2
        %v913 = vadd.f32 %v911, %v912
        %v914 = vrot.slane %v913, 1
        %v915 = vadd.f32 %v913, %v914
        %916 = vst [vmem:[%s289] sm:$0xff] %v846
        %917 = vst [vmem:[%s293] sm:$0xff] %v915
      $region40: #{cnn_block_forward.2} parent=31 // pred_fallthru
        _
      %s918 = smul.u32 32, %s21
      %p919 = scmp.lt.s32.totalorder %s918, 63
      %s920 = scalar_select %p919, %s918, 63
      %s921 = smul.addr %s920, 8
      %s922 = scalar_lea.vmem %s3, %s921
      %p923 = scmp.lt.s32.totalorder %s21, 1
      %s924 = scalar_select %p923, %s21, 1
      %s925 = smul.addr %s924, 8
      %s926 = scalar_lea.vmem %s4, %s925
      %p927 = scmp.lt.s32.totalorder %s21, 1
      %s928 = scalar_select %p927, %s21, 1
      %s929 = smul.addr %s928, 8
      %s930 = scalar_lea.vmem %s5, %s929
      // Predicated region
      $region41: #{cnn_block_forward.2} parent=31 // pred_check
        %p931 = pneg %p122
      $region42: #{cnn_block_forward.2} parent=31 // pred_check_branch
        %933 = sbr.rel (%p931) target = $region44
      $region43: #{cnn_block_forward.2} parent=31 // pred_region
        %s934 = smul.u32 32, %s21
      $region44: #{cnn_block_forward.2} parent=31 // pred_fallthru
        _
      // Predicated region
      $region45: #{cnn_block_forward.2} parent=31 // pred_check
        %p935 = pneg %p148
      $region46: #{cnn_block_forward.2} parent=31 // pred_check_branch
        %937 = sbr.rel (%p935) target = $region48
      $region47: #{cnn_block_forward.2} parent=31 // pred_region
        _
      $region48: #{cnn_block_forward.2} parent=31 // pred_fallthru
        _
      // Predicated region
      $region49: #{cnn_block_forward.2} parent=31 // pred_check
        %p938 = pneg %p174
      $region50: #{cnn_block_forward.2} parent=31 // pred_check_branch
        %940 = sbr.rel (%p938) target = $region52
      $region51: #{cnn_block_forward.2} parent=31 // pred_region
        _
      $region52: #{cnn_block_forward.2} parent=31 // pred_fallthru
        _
    $region32: #{cnn_block_forward.2} parent=5 // pred_fallthru
      _
    %p941 = scmp.le.s32.totalorder 2, %s12
    // Predicated region
    $region53: #{cnn_block_forward.2} parent=5 // pred_check
      %p942 = pneg %p941
    $region54: #{cnn_block_forward.2} parent=5 // pred_check_branch
      %944 = sbr.rel (%p942) target = $region56
    $region55: #{cnn_block_forward.2} parent=5 // pred_region
      %s945 = ssub.s32 %s12, 2
      // Predicated region
      $region57: #{cnn_block_forward.2} parent=55 // pred_check
        %p946 = pneg %p128
      $region58: #{cnn_block_forward.2} parent=55 // pred_check_branch
        %948 = sbr.rel (%p946) target = $region60
      $region59: #{cnn_block_forward.2} parent=55 // pred_region
        %s949 = smul.u32 32, %s23
        %p950 = scmp.lt.s32.totalorder %s949, 63
        %s951 = scalar_select %p950, %s949, 63
        %s952 = smul.addr %s951, 8
        %s953 = scalar_lea.vmem %s3, %s952
      $region60: #{cnn_block_forward.2} parent=55 // pred_fallthru
        _
      // Predicated region
      $region61: #{cnn_block_forward.2} parent=55 // pred_check
        %p954 = pneg %p154
      $region62: #{cnn_block_forward.2} parent=55 // pred_check_branch
        %956 = sbr.rel (%p954) target = $region64
      $region63: #{cnn_block_forward.2} parent=55 // pred_region
        %p957 = scmp.lt.s32.totalorder %s23, 1
        %s958 = scalar_select %p957, %s23, 1
        %s959 = smul.addr %s958, 8
        %s960 = scalar_lea.vmem %s4, %s959
      $region64: #{cnn_block_forward.2} parent=55 // pred_fallthru
        _
      // Predicated region
      $region65: #{cnn_block_forward.2} parent=55 // pred_check
        %p961 = pneg %p180
      $region66: #{cnn_block_forward.2} parent=55 // pred_check_branch
        %963 = sbr.rel (%p961) target = $region68
      $region67: #{cnn_block_forward.2} parent=55 // pred_region
        %p964 = scmp.lt.s32.totalorder %s23, 1
        %s965 = scalar_select %p964, %s23, 1
        %s966 = smul.addr %s965, 8
        %s967 = scalar_lea.vmem %s5, %s966
      $region68: #{cnn_block_forward.2} parent=55 // pred_fallthru
        _
    $region56: #{cnn_block_forward.2} parent=5 // pred_fallthru
      _
  $region6: #{cnn_block_forward.2} parent=0 // loop_footer
    %s16 = sadd.s32 1, %s12
  $region7: #{cnn_block_forward.2} parent=0 // loop_footer_branch
    %11 = sbr.rel target = $region3
  $region8: #{cnn_block_forward.2} parent=0 // loop_exit
    _

</llo_original>
